<compile_context>
chip_gen: v7x
topology: tpu7x:2x2x1
jax: 0.10.0
libtpu: 0.0.40
codegen_flags: <defaults>
</compile_context>

<pallas_src>
import functools

import jax
import jax.numpy as jnp
from jax import lax
from jax.experimental import pallas as pl
from jax.experimental.pallas import tpu as pltpu


_LN_EPS = 1e-5          # torch.nn.LayerNorm default
_MIB = 1024 * 1024


def _make_kernel(tbt, n_x, n_l, dim, heads, dim_head, compute_dtype, out_dtype):
    inner = heads * dim_head

    def heads_to_batch(z2, n):
        # (tbt*n, heads*dim_head) -> (heads*tbt, n, dim_head).
        # One value-level relayout per operand (head stripes -> leading batch
        # dim); feeds *batched* MXU matmuls instead of per-head tiny matmuls.
        parts = [z2[:, h * dim_head:(h + 1) * dim_head].reshape(tbt, n, dim_head)
                 for h in range(heads)]
        return jnp.concatenate(parts, axis=0)

    def kernel(x_ref, lat_ref, ln_ref, wqkv_ref, wo_ref, out_ref):
        # ---- LayerNorm (f32 elementwise) on flattened row slabs --------------
        x2 = x_ref[...].reshape(tbt * n_x, dim).astype(jnp.float32)
        l2 = lat_ref[...].reshape(tbt * n_l, dim).astype(jnp.float32)

        ln = ln_ref[...]                              # (4, dim) packed f32 params
        g_x, b_x = ln[0:1, :], ln[1:2, :]
        g_l, b_l = ln[2:3, :], ln[3:4, :]

        def layernorm(v, g, b):
            mu = jnp.mean(v, axis=-1, keepdims=True)
            c = v - mu
            var = jnp.mean(c * c, axis=-1, keepdims=True)
            return c * lax.rsqrt(var + _LN_EPS) * g + b

        xn = layernorm(x2, g_x, b_x).astype(compute_dtype)      # (tbt*n_x, dim)
        latn = layernorm(l2, g_l, b_l).astype(compute_dtype)    # (tbt*n_l, dim)

        # ---- Projections: fused latent (q|k|v) matmul; media reuses k|v cols --
        w_all = wqkv_ref[...]                                    # (dim, 3*inner)
        qkv_l = jnp.dot(latn, w_all,
                        preferred_element_type=jnp.float32).astype(compute_dtype)
        kv_x = jnp.dot(xn, w_all[:, inner:],
                       preferred_element_type=jnp.float32).astype(compute_dtype)

        # ---- Heads to a leading batch position (once per operand) ------------
        q = heads_to_batch(qkv_l[:, :inner], n_l)                # (heads*tbt, n_l, dh)
        k_l = heads_to_batch(qkv_l[:, inner:2 * inner], n_l)
        v_l = heads_to_batch(qkv_l[:, 2 * inner:], n_l)
        k_x = heads_to_batch(kv_x[:, :inner], n_x)               # (heads*tbt, n_x, dh)
        v_x = heads_to_batch(kv_x[:, inner:], n_x)

        # ---- Batched attention over all heads / (b,t) slices at once ----------
        sim_x = jnp.einsum('bid,bjd->bij', q, k_x,
                           preferred_element_type=jnp.float32)   # (B, n_l, n_x)
        sim_l = jnp.einsum('bid,bjd->bij', q, k_l,
                           preferred_element_type=jnp.float32)   # (B, n_l, n_l)

        # Two-source softmax over [media ; latents] == softmax over the concat.
        m = jnp.maximum(jnp.max(sim_x, axis=-1, keepdims=True),
                        jnp.max(sim_l, axis=-1, keepdims=True))
        p_x = jnp.exp(sim_x - m)
        p_l = jnp.exp(sim_l - m)
        denom = (jnp.sum(p_x, axis=-1, keepdims=True)
                 + jnp.sum(p_l, axis=-1, keepdims=True))
        inv = 1.0 / denom              # exact divide; denom is only (B, n_l, 1)

        o = (jnp.einsum('bij,bjd->bid', p_x.astype(compute_dtype), v_x,
                        preferred_element_type=jnp.float32)
             + jnp.einsum('bij,bjd->bid', p_l.astype(compute_dtype), v_l,
                          preferred_element_type=jnp.float32))
        o = o * inv                                               # (B, n_l, dh) f32

        # ---- Heads back onto the lane axis: single lane-dense slab -----------
        o2 = jnp.concatenate(
            [o[h * tbt:(h + 1) * tbt].reshape(tbt * n_l, dim_head)
             for h in range(heads)],
            axis=-1).astype(compute_dtype)                        # (tbt*n_l, inner)

        # ---- Output projection: one big (inner -> dim) matmul ----------------
        out2 = jnp.dot(o2, wo_ref[...], preferred_element_type=jnp.float32)
        out_ref[...] = out2.reshape(tbt, n_l, dim).astype(out_dtype)

    return kernel


def _vmem_estimate_bytes(tbt, n_x, n_l, dim, heads, dim_head,
                         in_bytes, cd_bytes, out_bytes, w_bytes):
    """Conservative per-grid-step working-set estimate (all heads live at once)."""
    inner = heads * dim_head
    f32 = 4
    rx, rl = tbt * n_x, tbt * n_l
    est = 0
    est += 2 * (rx + rl) * dim * in_bytes                 # double-buffered input blocks
    est += 2 * rl * dim * out_bytes                       # double-buffered output block
    est += (3 * inner + inner) * dim * w_bytes            # fused w_qkv + w_out (single-buffered)
    est += 4 * dim * f32                                  # packed LN params
    est += (rx + rl) * dim * (2 * f32 + cd_bytes)         # LN f32 temporaries + casts
    est += (rl * 3 + rx * 2) * inner * (f32 + cd_bytes)   # projections + head-major copies
    est += tbt * heads * n_l * (n_x + n_l) * (2 * f32 + cd_bytes)  # sim/p for ALL heads
    est += rl * inner * (f32 + cd_bytes) + rl * dim * f32          # attn out, o2, out2
    return est


def _vmem_budget_and_limit():
    """Generation-aware VMEM budgeting: v7x has 64 MiB/TC, v5e/v6e have 128 MiB."""
    try:
        phys = int(pltpu.get_tpu_info().vmem_capacity_bytes)
    except Exception:
        phys = None
    if phys is None or phys <= 64 * _MIB:
        return 20 * _MIB, 48 * _MIB          # v7x-safe defaults
    return 36 * _MIB, 80 * _MIB              # v5e / v6e: raise the 32 MiB scoped default


def _choose_tbt(bt, n_x, n_l, dim, heads, dim_head,
                in_bytes, cd_bytes, out_bytes, w_bytes, budget_bytes):
    """Largest divisor of bt fitting the VMEM budget; prefer an even number of
    grid steps (both v7x TensorCores stay busy) and MXU-tile-aligned row counts."""
    candidates = []
    for d in range(1, bt + 1):
        if bt % d:
            continue
        if _vmem_estimate_bytes(d, n_x, n_l, dim, heads, dim_head,
                                in_bytes, cd_bytes, out_bytes, w_bytes) > budget_bytes:
            continue
        steps = bt // d
        even_steps = steps >= 2 and steps % 2 == 0
        aligned = (d * n_x) % 128 == 0 and (d * n_l) % 128 == 0
        candidates.append((even_steps, aligned, d))
    if not candidates:
        return 1
    return max(candidates)[-1]


def _const_spec(shape):
    index_map = lambda i: (0,) * len(shape)
    if hasattr(pl, "Buffered"):
        try:
            # Constant blocks (weights / LN params): single-buffer them -- their
            # index_map never changes, so double-buffering only wastes VMEM.
            return pl.BlockSpec(shape, index_map, pipeline_mode=pl.Buffered(1))
        except Exception:
            pass
    return pl.BlockSpec(shape, index_map)


def perceiver_attention(x, latents, params, *, heads, dim_head,
                        compute_dtype=jnp.bfloat16):
    """Pallas implementation of PerceiverAttention.forward."""
    b, t, n_x, dim = x.shape
    _, _, n_l, _ = latents.shape
    inner = heads * dim_head
    bt = b * t
    scale = dim_head ** -0.5
    out_dtype = x.dtype

    # bf16 inputs: halves HBM->VMEM DMA and the double-buffered input-block VMEM.
    xf = x.reshape(bt, n_x, dim).astype(compute_dtype)
    lf = latents.reshape(bt, n_l, dim).astype(compute_dtype)

    # Both LayerNorms' gamma/beta packed into a single resident (4, dim) buffer.
    ln_pack = jnp.stack([
        params["ln_media_gamma"], params["ln_media_beta"],
        params["ln_latents_gamma"], params["ln_latents_beta"],
    ], axis=0).astype(jnp.float32)

    # Fused latent projection weight: [w_q * scale | w_kv] -> (dim, 3*inner).
    # (softmax scale folded into w_q at trace time -- free.)
    wqkv = jnp.concatenate([params["w_q"] * scale, params["w_kv"]],
                           axis=1).astype(compute_dtype)
    wo = params["w_out"].astype(compute_dtype)

    cd_bytes = jnp.dtype(compute_dtype).itemsize
    out_bytes = jnp.dtype(out_dtype).itemsize

    budget, vmem_limit = _vmem_budget_and_limit()
    tbt = _choose_tbt(bt, n_x, n_l, dim, heads, dim_head,
                      cd_bytes, cd_bytes, out_bytes, cd_bytes, budget)
    grid = (bt // tbt,)

    kernel = _make_kernel(tbt, n_x, n_l, dim, heads, dim_head,
                          compute_dtype, out_dtype)

    out = pl.pallas_call(
        kernel,
        out_shape=jax.ShapeDtypeStruct((bt, n_l, dim), out_dtype),
        grid=grid,
        in_specs=[
            pl.BlockSpec((tbt, n_x, dim), lambda i: (i, 0, 0)),
            pl.BlockSpec((tbt, n_l, dim), lambda i: (i, 0, 0)),
            _const_spec((4, dim)),
            _const_spec((dim, 3 * inner)),
            _const_spec((inner, dim)),
        ],
        out_specs=pl.BlockSpec((tbt, n_l, dim), lambda i: (i, 0, 0)),
        compiler_params=pltpu.CompilerParams(
            dimension_semantics=("parallel",),
            vmem_limit_bytes=vmem_limit,
        ),
    )(xf, lf, ln_pack, wqkv, wo)

    return out.reshape(b, t, n_l, dim)


def perceiver_attention_ref(x, latents, params, *, heads, dim_head):
    """Pure-JAX f32 reference mirroring the PyTorch forward."""
    eps = 1e-5
    inner = heads * dim_head
    scale = dim_head ** -0.5

    def layernorm(v, g, b):
        mu = jnp.mean(v, axis=-1, keepdims=True)
        var = jnp.mean((v - mu) ** 2, axis=-1, keepdims=True)
        return (v - mu) * lax.rsqrt(var + eps) * g + b

    xn = layernorm(x, params["ln_media_gamma"], params["ln_media_beta"])
    latn = layernorm(latents, params["ln_latents_gamma"], params["ln_latents_beta"])

    q = latn @ params["w_q"]                                  # (b, t, n_l, inner)
    kv_in = jnp.concatenate([xn, latn], axis=-2)              # (b, t, n_kv, dim)
    kv = kv_in @ params["w_kv"]
    k, v = kv[..., :inner], kv[..., inner:]

    def split_heads(z):  # b t n (h d) -> b h t n d
        b_, t_, n_, _ = z.shape
        return z.reshape(b_, t_, n_, heads, dim_head).transpose(0, 3, 1, 2, 4)

    qh, kh, vh = split_heads(q) * scale, split_heads(k), split_heads(v)
    sim = jnp.einsum("bhtid,bhtjd->bhtij", qh, kh)
    sim = sim - jnp.max(sim, axis=-1, keepdims=True)
    attn = jax.nn.softmax(sim, axis=-1)
    o = jnp.einsum("bhtij,bhtjd->bhtid", attn, vh)
    b_, h_, t_, n_, d_ = o.shape
    o = o.transpose(0, 2, 3, 1, 4).reshape(b_, t_, n_, h_ * d_)
    return o @ params["w_out"]


def init_params(key, dim, heads, dim_head):
    inner = heads * dim_head
    k1, k2, k3 = jax.random.split(key, 3)
    return {
        "ln_media_gamma": jnp.ones((dim,), jnp.float32),
        "ln_media_beta": jnp.zeros((dim,), jnp.float32),
        "ln_latents_gamma": jnp.ones((dim,), jnp.float32),
        "ln_latents_beta": jnp.zeros((dim,), jnp.float32),
        # Stored pre-transposed relative to torch's nn.Linear.weight: y = x @ W
        "w_q": 0.05 * jax.random.normal(k1, (dim, inner), jnp.float32),
        "w_kv": 0.05 * jax.random.normal(k2, (dim, 2 * inner), jnp.float32),
        "w_out": 0.05 * jax.random.normal(k3, (inner, dim), jnp.float32),
    }


if __name__ == "__main__":
    # Small shapes consistent with the forward pass.
    B, T, N_X, N_L = 2, 2, 16, 8
    DIM, HEADS, DIM_HEAD = 32, 4, 8

    key = jax.random.PRNGKey(0)
    kx, kl, kp = jax.random.split(key, 3)
    x = jax.random.normal(kx, (B, T, N_X, DIM), jnp.float32)
    latents = jax.random.normal(kl, (B, T, N_L, DIM), jnp.float32)
    params = init_params(kp, DIM, HEADS, DIM_HEAD)

    fn = functools.partial(perceiver_attention, heads=HEADS, dim_head=DIM_HEAD)
    out = jax.jit(lambda a, b: fn(a, b, params))(x, latents)
    out = jax.block_until_ready(out)

    ref = perceiver_attention_ref(x, latents, params, heads=HEADS, dim_head=DIM_HEAD)
    assert out.shape == (B, T, N_L, DIM)
    # bf16 inputs/weights on the MXU path -> loosen tolerance vs the f32 reference.
    max_err = float(jnp.max(jnp.abs(out.astype(jnp.float32) - ref)))
    assert max_err < 2.5e-2, max_err

    print("KERNEL_OK")
</pallas_src>

<mosaic_0001>
module attributes {stable_mosaic.version = 11 : i64} {
  func.func @kernel(%arg0: i32, %arg1: memref<2x16x32xbf16, #tpu.memory_space<vmem>>, %arg2: memref<2x8x32xbf16, #tpu.memory_space<vmem>>, %arg3: memref<4x32xf32, #tpu.memory_space<vmem>>, %arg4: memref<32x96xbf16, #tpu.memory_space<vmem>>, %arg5: memref<32x32xbf16, #tpu.memory_space<vmem>>, %arg6: memref<2x8x32xf32, #tpu.memory_space<vmem>>) attributes {dimension_semantics = [#tpu.dimension_semantics<parallel>], iteration_bounds = array<i64: 2>, scalar_prefetch = 0 : i64, scratch_operands = 0 : i64, tpu.core_type = #tpu.core_type<tc>, window_params = [{transform_indices = @transform_0, window_bounds = array<i64: 2, 16, 32>}, {transform_indices = @transform_1, window_bounds = array<i64: 2, 8, 32>}, {pipeline_mode = #tpu.pipeline_mode<synchronous>, transform_indices = @transform_2, window_bounds = array<i64: 4, 32>}, {pipeline_mode = #tpu.pipeline_mode<synchronous>, transform_indices = @transform_3, window_bounds = array<i64: 32, 96>}, {pipeline_mode = #tpu.pipeline_mode<synchronous>, transform_indices = @transform_4, window_bounds = array<i64: 32, 32>}, {transform_indices = @transform_5, window_bounds = array<i64: 2, 8, 32>}]} {
    %c0 = arith.constant 0 : index
    %c0_0 = arith.constant 0 : index
    %c0_1 = arith.constant 0 : index
    %0 = vector.load %arg1[%c0, %c0_0, %c0_1] : memref<2x16x32xbf16, #tpu.memory_space<vmem>>, vector<2x16x32xbf16>
    %1 = vector.shape_cast %0 : vector<2x16x32xbf16> to vector<32x32xbf16>
    %2 = arith.extf %1 : vector<32x32xbf16> to vector<32x32xf32>
    %c0_2 = arith.constant 0 : index
    %c0_3 = arith.constant 0 : index
    %c0_4 = arith.constant 0 : index
    %3 = vector.load %arg2[%c0_2, %c0_3, %c0_4] : memref<2x8x32xbf16, #tpu.memory_space<vmem>>, vector<2x8x32xbf16>
    %4 = vector.shape_cast %3 : vector<2x8x32xbf16> to vector<16x32xbf16>
    %5 = arith.extf %4 : vector<16x32xbf16> to vector<16x32xf32>
    %c0_5 = arith.constant 0 : index
    %c0_6 = arith.constant 0 : index
    %6 = vector.load %arg3[%c0_5, %c0_6] : memref<4x32xf32, #tpu.memory_space<vmem>>, vector<4x32xf32>
    %7 = vector.extract_strided_slice %6 {offsets = [0, 0], sizes = [1, 32], strides = [1, 1]} : vector<4x32xf32> to vector<1x32xf32>
    %8 = vector.extract_strided_slice %6 {offsets = [1, 0], sizes = [1, 32], strides = [1, 1]} : vector<4x32xf32> to vector<1x32xf32>
    %9 = vector.extract_strided_slice %6 {offsets = [2, 0], sizes = [1, 32], strides = [1, 1]} : vector<4x32xf32> to vector<1x32xf32>
    %10 = vector.extract_strided_slice %6 {offsets = [3, 0], sizes = [1, 32], strides = [1, 1]} : vector<4x32xf32> to vector<1x32xf32>
    %cst = arith.constant dense<0.000000e+00> : vector<32xf32>
    %11 = vector.multi_reduction <add>, %2, %cst [1] : vector<32x32xf32> to vector<32xf32>
    %12 = vector.shape_cast %11 : vector<32xf32> to vector<32x1xf32>
    %cst_7 = arith.constant 3.200000e+01 : f32
    %13 = vector.broadcast %cst_7 : f32 to vector<32x1xf32>
    %14 = arith.divf %12, %13 : vector<32x1xf32>
    %15 = vector.broadcast %14 : vector<32x1xf32> to vector<32x32xf32>
    %16 = arith.subf %2, %15 : vector<32x32xf32>
    %17 = arith.mulf %16, %16 : vector<32x32xf32>
    %cst_8 = arith.constant dense<0.000000e+00> : vector<32xf32>
    %18 = vector.multi_reduction <add>, %17, %cst_8 [1] : vector<32x32xf32> to vector<32xf32>
    %19 = vector.shape_cast %18 : vector<32xf32> to vector<32x1xf32>
    %cst_9 = arith.constant 3.200000e+01 : f32
    %20 = vector.broadcast %cst_9 : f32 to vector<32x1xf32>
    %21 = arith.divf %19, %20 : vector<32x1xf32>
    %cst_10 = arith.constant 9.99999974E-6 : f32
    %22 = vector.broadcast %cst_10 : f32 to vector<32x1xf32>
    %23 = arith.addf %21, %22 : vector<32x1xf32>
    %24 = math.rsqrt %23 : vector<32x1xf32>
    %25 = vector.broadcast %24 : vector<32x1xf32> to vector<32x32xf32>
    %26 = arith.mulf %16, %25 : vector<32x32xf32>
    %27 = vector.broadcast %7 : vector<1x32xf32> to vector<32x32xf32>
    %28 = arith.mulf %26, %27 : vector<32x32xf32>
    %29 = vector.broadcast %8 : vector<1x32xf32> to vector<32x32xf32>
    %30 = arith.addf %28, %29 : vector<32x32xf32>
    %31 = arith.truncf %30 : vector<32x32xf32> to vector<32x32xbf16>
    %cst_11 = arith.constant dense<0.000000e+00> : vector<16xf32>
    %32 = vector.multi_reduction <add>, %5, %cst_11 [1] : vector<16x32xf32> to vector<16xf32>
    %33 = vector.shape_cast %32 : vector<16xf32> to vector<16x1xf32>
    %cst_12 = arith.constant 3.200000e+01 : f32
    %34 = vector.broadcast %cst_12 : f32 to vector<16x1xf32>
    %35 = arith.divf %33, %34 : vector<16x1xf32>
    %36 = vector.broadcast %35 : vector<16x1xf32> to vector<16x32xf32>
    %37 = arith.subf %5, %36 : vector<16x32xf32>
    %38 = arith.mulf %37, %37 : vector<16x32xf32>
    %cst_13 = arith.constant dense<0.000000e+00> : vector<16xf32>
    %39 = vector.multi_reduction <add>, %38, %cst_13 [1] : vector<16x32xf32> to vector<16xf32>
    %40 = vector.shape_cast %39 : vector<16xf32> to vector<16x1xf32>
    %cst_14 = arith.constant 3.200000e+01 : f32
    %41 = vector.broadcast %cst_14 : f32 to vector<16x1xf32>
    %42 = arith.divf %40, %41 : vector<16x1xf32>
    %cst_15 = arith.constant 9.99999974E-6 : f32
    %43 = vector.broadcast %cst_15 : f32 to vector<16x1xf32>
    %44 = arith.addf %42, %43 : vector<16x1xf32>
    %45 = math.rsqrt %44 : vector<16x1xf32>
    %46 = vector.broadcast %45 : vector<16x1xf32> to vector<16x32xf32>
    %47 = arith.mulf %37, %46 : vector<16x32xf32>
    %48 = vector.broadcast %9 : vector<1x32xf32> to vector<16x32xf32>
    %49 = arith.mulf %47, %48 : vector<16x32xf32>
    %50 = vector.broadcast %10 : vector<1x32xf32> to vector<16x32xf32>
    %51 = arith.addf %49, %50 : vector<16x32xf32>
    %52 = arith.truncf %51 : vector<16x32xf32> to vector<16x32xbf16>
    %c0_16 = arith.constant 0 : index
    %c0_17 = arith.constant 0 : index
    %53 = vector.load %arg4[%c0_16, %c0_17] : memref<32x96xbf16, #tpu.memory_space<vmem>>, vector<32x96xbf16>
    %cst_18 = arith.constant dense<0.000000e+00> : vector<16x96xf32>
    %54 = tpu.matmul %52, %53, %cst_18 {dimension_numbers = #tpu.dot_dimension_numbers<[1], [0], [0], [1], [0, 0, 1, 1], [], []>} : vector<16x32xbf16>, vector<32x96xbf16>, vector<16x96xf32> -> vector<16x96xf32>
    %55 = arith.truncf %54 : vector<16x96xf32> to vector<16x96xbf16>
    %56 = vector.extract_strided_slice %53 {offsets = [0, 32], sizes = [32, 64], strides = [1, 1]} : vector<32x96xbf16> to vector<32x64xbf16>
    %cst_19 = arith.constant dense<0.000000e+00> : vector<32x64xf32>
    %57 = tpu.matmul %31, %56, %cst_19 {dimension_numbers = #tpu.dot_dimension_numbers<[1], [0], [0], [1], [0, 0, 1, 1], [], []>} : vector<32x32xbf16>, vector<32x64xbf16>, vector<32x64xf32> -> vector<32x64xf32>
    %58 = arith.truncf %57 : vector<32x64xf32> to vector<32x64xbf16>
    %59 = vector.extract_strided_slice %55 {offsets = [0, 0], sizes = [16, 32], strides = [1, 1]} : vector<16x96xbf16> to vector<16x32xbf16>
    %60 = vector.extract_strided_slice %59 {offsets = [0, 0], sizes = [16, 8], strides = [1, 1]} : vector<16x32xbf16> to vector<16x8xbf16>
    %61 = vector.shape_cast %60 : vector<16x8xbf16> to vector<2x8x8xbf16>
    %62 = vector.extract_strided_slice %59 {offsets = [0, 8], sizes = [16, 8], strides = [1, 1]} : vector<16x32xbf16> to vector<16x8xbf16>
    %63 = vector.shape_cast %62 : vector<16x8xbf16> to vector<2x8x8xbf16>
    %64 = vector.extract_strided_slice %59 {offsets = [0, 16], sizes = [16, 8], strides = [1, 1]} : vector<16x32xbf16> to vector<16x8xbf16>
    %65 = vector.shape_cast %64 : vector<16x8xbf16> to vector<2x8x8xbf16>
    %66 = vector.extract_strided_slice %59 {offsets = [0, 24], sizes = [16, 8], strides = [1, 1]} : vector<16x32xbf16> to vector<16x8xbf16>
    %67 = vector.shape_cast %66 : vector<16x8xbf16> to vector<2x8x8xbf16>
    %68 = tpu.concatenate %61, %63, %65, %67 in 0 : vector<2x8x8xbf16>, vector<2x8x8xbf16>, vector<2x8x8xbf16>, vector<2x8x8xbf16> -> vector<8x8x8xbf16>
    %69 = vector.extract_strided_slice %55 {offsets = [0, 32], sizes = [16, 32], strides = [1, 1]} : vector<16x96xbf16> to vector<16x32xbf16>
    %70 = vector.extract_strided_slice %69 {offsets = [0, 0], sizes = [16, 8], strides = [1, 1]} : vector<16x32xbf16> to vector<16x8xbf16>
    %71 = vector.shape_cast %70 : vector<16x8xbf16> to vector<2x8x8xbf16>
    %72 = vector.extract_strided_slice %69 {offsets = [0, 8], sizes = [16, 8], strides = [1, 1]} : vector<16x32xbf16> to vector<16x8xbf16>
    %73 = vector.shape_cast %72 : vector<16x8xbf16> to vector<2x8x8xbf16>
    %74 = vector.extract_strided_slice %69 {offsets = [0, 16], sizes = [16, 8], strides = [1, 1]} : vector<16x32xbf16> to vector<16x8xbf16>
    %75 = vector.shape_cast %74 : vector<16x8xbf16> to vector<2x8x8xbf16>
    %76 = vector.extract_strided_slice %69 {offsets = [0, 24], sizes = [16, 8], strides = [1, 1]} : vector<16x32xbf16> to vector<16x8xbf16>
    %77 = vector.shape_cast %76 : vector<16x8xbf16> to vector<2x8x8xbf16>
    %78 = tpu.concatenate %71, %73, %75, %77 in 0 : vector<2x8x8xbf16>, vector<2x8x8xbf16>, vector<2x8x8xbf16>, vector<2x8x8xbf16> -> vector<8x8x8xbf16>
    %79 = vector.extract_strided_slice %55 {offsets = [0, 64], sizes = [16, 32], strides = [1, 1]} : vector<16x96xbf16> to vector<16x32xbf16>
    %80 = vector.extract_strided_slice %79 {offsets = [0, 0], sizes = [16, 8], strides = [1, 1]} : vector<16x32xbf16> to vector<16x8xbf16>
    %81 = vector.shape_cast %80 : vector<16x8xbf16> to vector<2x8x8xbf16>
    %82 = vector.extract_strided_slice %79 {offsets = [0, 8], sizes = [16, 8], strides = [1, 1]} : vector<16x32xbf16> to vector<16x8xbf16>
    %83 = vector.shape_cast %82 : vector<16x8xbf16> to vector<2x8x8xbf16>
    %84 = vector.extract_strided_slice %79 {offsets = [0, 16], sizes = [16, 8], strides = [1, 1]} : vector<16x32xbf16> to vector<16x8xbf16>
    %85 = vector.shape_cast %84 : vector<16x8xbf16> to vector<2x8x8xbf16>
    %86 = vector.extract_strided_slice %79 {offsets = [0, 24], sizes = [16, 8], strides = [1, 1]} : vector<16x32xbf16> to vector<16x8xbf16>
    %87 = vector.shape_cast %86 : vector<16x8xbf16> to vector<2x8x8xbf16>
    %88 = tpu.concatenate %81, %83, %85, %87 in 0 : vector<2x8x8xbf16>, vector<2x8x8xbf16>, vector<2x8x8xbf16>, vector<2x8x8xbf16> -> vector<8x8x8xbf16>
    %89 = vector.extract_strided_slice %58 {offsets = [0, 0], sizes = [32, 32], strides = [1, 1]} : vector<32x64xbf16> to vector<32x32xbf16>
    %90 = vector.extract_strided_slice %89 {offsets = [0, 0], sizes = [32, 8], strides = [1, 1]} : vector<32x32xbf16> to vector<32x8xbf16>
    %91 = vector.shape_cast %90 : vector<32x8xbf16> to vector<2x16x8xbf16>
    %92 = vector.extract_strided_slice %89 {offsets = [0, 8], sizes = [32, 8], strides = [1, 1]} : vector<32x32xbf16> to vector<32x8xbf16>
    %93 = vector.shape_cast %92 : vector<32x8xbf16> to vector<2x16x8xbf16>
    %94 = vector.extract_strided_slice %89 {offsets = [0, 16], sizes = [32, 8], strides = [1, 1]} : vector<32x32xbf16> to vector<32x8xbf16>
    %95 = vector.shape_cast %94 : vector<32x8xbf16> to vector<2x16x8xbf16>
    %96 = vector.extract_strided_slice %89 {offsets = [0, 24], sizes = [32, 8], strides = [1, 1]} : vector<32x32xbf16> to vector<32x8xbf16>
    %97 = vector.shape_cast %96 : vector<32x8xbf16> to vector<2x16x8xbf16>
    %98 = tpu.concatenate %91, %93, %95, %97 in 0 : vector<2x16x8xbf16>, vector<2x16x8xbf16>, vector<2x16x8xbf16>, vector<2x16x8xbf16> -> vector<8x16x8xbf16>
    %99 = vector.extract_strided_slice %58 {offsets = [0, 32], sizes = [32, 32], strides = [1, 1]} : vector<32x64xbf16> to vector<32x32xbf16>
    %100 = vector.extract_strided_slice %99 {offsets = [0, 0], sizes = [32, 8], strides = [1, 1]} : vector<32x32xbf16> to vector<32x8xbf16>
    %101 = vector.shape_cast %100 : vector<32x8xbf16> to vector<2x16x8xbf16>
    %102 = vector.extract_strided_slice %99 {offsets = [0, 8], sizes = [32, 8], strides = [1, 1]} : vector<32x32xbf16> to vector<32x8xbf16>
    %103 = vector.shape_cast %102 : vector<32x8xbf16> to vector<2x16x8xbf16>
    %104 = vector.extract_strided_slice %99 {offsets = [0, 16], sizes = [32, 8], strides = [1, 1]} : vector<32x32xbf16> to vector<32x8xbf16>
    %105 = vector.shape_cast %104 : vector<32x8xbf16> to vector<2x16x8xbf16>
    %106 = vector.extract_strided_slice %99 {offsets = [0, 24], sizes = [32, 8], strides = [1, 1]} : vector<32x32xbf16> to vector<32x8xbf16>
    %107 = vector.shape_cast %106 : vector<32x8xbf16> to vector<2x16x8xbf16>
    %108 = tpu.concatenate %101, %103, %105, %107 in 0 : vector<2x16x8xbf16>, vector<2x16x8xbf16>, vector<2x16x8xbf16>, vector<2x16x8xbf16> -> vector<8x16x8xbf16>
    "tpu.trace_start"() <{level = 10 : i32, message = "bid,bjd->bij"}> : () -> ()
    %cst_20 = arith.constant dense<0.000000e+00> : vector<8x8x16xf32>
    %109 = tpu.matmul %68, %98, %cst_20 {dimension_numbers = #tpu.dot_dimension_numbers<[2], [2], [1], [1], [0, 0, 0, 1, 1, 1], [0], [0]>} : vector<8x8x8xbf16>, vector<8x16x8xbf16>, vector<8x8x16xf32> -> vector<8x8x16xf32>
    %cst_21 = arith.constant dense<0.000000e+00> : vector<8x8x8xf32>
    %110 = tpu.matmul %68, %78, %cst_21 {dimension_numbers = #tpu.dot_dimension_numbers<[2], [2], [1], [1], [0, 0, 0, 1, 1, 1], [0], [0]>} : vector<8x8x8xbf16>, vector<8x8x8xbf16>, vector<8x8x8xf32> -> vector<8x8x8xf32>
    "tpu.trace_stop"() : () -> ()
    %cst_22 = arith.constant dense<0xFF800000> : vector<8x8xf32>
    %111 = vector.multi_reduction <maximumf>, %109, %cst_22 [2] : vector<8x8x16xf32> to vector<8x8xf32>
    %112 = vector.shape_cast %111 : vector<8x8xf32> to vector<8x8x1xf32>
    %cst_23 = arith.constant dense<0xFF800000> : vector<8x8xf32>
    %113 = vector.multi_reduction <maximumf>, %110, %cst_23 [2] : vector<8x8x8xf32> to vector<8x8xf32>
    %114 = vector.shape_cast %113 : vector<8x8xf32> to vector<8x8x1xf32>
    %115 = arith.maximumf %112, %114 : vector<8x8x1xf32>
    %116 = vector.broadcast %115 : vector<8x8x1xf32> to vector<8x8x16xf32>
    %117 = arith.subf %109, %116 : vector<8x8x16xf32>
    %118 = math.exp %117 : vector<8x8x16xf32>
    %119 = vector.broadcast %115 : vector<8x8x1xf32> to vector<8x8x8xf32>
    %120 = arith.subf %110, %119 : vector<8x8x8xf32>
    %121 = math.exp %120 : vector<8x8x8xf32>
    %cst_24 = arith.constant dense<0.000000e+00> : vector<8x8xf32>
    %122 = vector.multi_reduction <add>, %118, %cst_24 [2] : vector<8x8x16xf32> to vector<8x8xf32>
    %123 = vector.shape_cast %122 : vector<8x8xf32> to vector<8x8x1xf32>
    %cst_25 = arith.constant dense<0.000000e+00> : vector<8x8xf32>
    %124 = vector.multi_reduction <add>, %121, %cst_25 [2] : vector<8x8x8xf32> to vector<8x8xf32>
    %125 = vector.shape_cast %124 : vector<8x8xf32> to vector<8x8x1xf32>
    %126 = arith.addf %123, %125 : vector<8x8x1xf32>
    %cst_26 = arith.constant 1.000000e+00 : f32
    %127 = vector.broadcast %cst_26 : f32 to vector<8x8x1xf32>
    %128 = arith.divf %127, %126 : vector<8x8x1xf32>
    %129 = arith.truncf %118 : vector<8x8x16xf32> to vector<8x8x16xbf16>
    "tpu.trace_start"() <{level = 10 : i32, message = "bij,bjd->bid"}> : () -> ()
    %cst_27 = arith.constant dense<0.000000e+00> : vector<8x8x8xf32>
    %130 = tpu.matmul %129, %108, %cst_27 {dimension_numbers = #tpu.dot_dimension_numbers<[2], [1], [1], [2], [0, 0, 0, 1, 1, 2], [0], [0]>} : vector<8x8x16xbf16>, vector<8x16x8xbf16>, vector<8x8x8xf32> -> vector<8x8x8xf32>
    "tpu.trace_stop"() : () -> ()
    %131 = arith.truncf %121 : vector<8x8x8xf32> to vector<8x8x8xbf16>
    "tpu.trace_start"() <{level = 10 : i32, message = "bij,bjd->bid"}> : () -> ()
    %cst_28 = arith.constant dense<0.000000e+00> : vector<8x8x8xf32>
    %132 = tpu.matmul %131, %88, %cst_28 {dimension_numbers = #tpu.dot_dimension_numbers<[2], [1], [1], [2], [0, 0, 0, 1, 1, 2], [0], [0]>} : vector<8x8x8xbf16>, vector<8x8x8xbf16>, vector<8x8x8xf32> -> vector<8x8x8xf32>
    "tpu.trace_stop"() : () -> ()
    %133 = arith.addf %130, %132 : vector<8x8x8xf32>
    %134 = vector.broadcast %128 : vector<8x8x1xf32> to vector<8x8x8xf32>
    %135 = arith.mulf %133, %134 : vector<8x8x8xf32>
    %136 = vector.extract_strided_slice %135 {offsets = [0, 0, 0], sizes = [2, 8, 8], strides = [1, 1, 1]} : vector<8x8x8xf32> to vector<2x8x8xf32>
    %137 = vector.shape_cast %136 : vector<2x8x8xf32> to vector<16x8xf32>
    %138 = vector.extract_strided_slice %135 {offsets = [2, 0, 0], sizes = [2, 8, 8], strides = [1, 1, 1]} : vector<8x8x8xf32> to vector<2x8x8xf32>
    %139 = vector.shape_cast %138 : vector<2x8x8xf32> to vector<16x8xf32>
    %140 = vector.extract_strided_slice %135 {offsets = [4, 0, 0], sizes = [2, 8, 8], strides = [1, 1, 1]} : vector<8x8x8xf32> to vector<2x8x8xf32>
    %141 = vector.shape_cast %140 : vector<2x8x8xf32> to vector<16x8xf32>
    %142 = vector.extract_strided_slice %135 {offsets = [6, 0, 0], sizes = [2, 8, 8], strides = [1, 1, 1]} : vector<8x8x8xf32> to vector<2x8x8xf32>
    %143 = vector.shape_cast %142 : vector<2x8x8xf32> to vector<16x8xf32>
    %144 = tpu.concatenate %137, %139, %141, %143 in 1 : vector<16x8xf32>, vector<16x8xf32>, vector<16x8xf32>, vector<16x8xf32> -> vector<16x32xf32>
    %145 = arith.truncf %144 : vector<16x32xf32> to vector<16x32xbf16>
    %c0_29 = arith.constant 0 : index
    %c0_30 = arith.constant 0 : index
    %146 = vector.load %arg5[%c0_29, %c0_30] : memref<32x32xbf16, #tpu.memory_space<vmem>>, vector<32x32xbf16>
    %cst_31 = arith.constant dense<0.000000e+00> : vector<16x32xf32>
    %147 = tpu.matmul %145, %146, %cst_31 {dimension_numbers = #tpu.dot_dimension_numbers<[1], [0], [0], [1], [0, 0, 1, 1], [], []>} : vector<16x32xbf16>, vector<32x32xbf16>, vector<16x32xf32> -> vector<16x32xf32>
    %148 = vector.shape_cast %147 : vector<16x32xf32> to vector<2x8x32xf32>
    %c0_32 = arith.constant 0 : index
    %c0_33 = arith.constant 0 : index
    %c0_34 = arith.constant 0 : index
    %149 = vector.load %arg6[%c0_32, %c0_33, %c0_34] : memref<2x8x32xf32, #tpu.memory_space<vmem>>, vector<2x8x32xf32>
    tpu.vector_store %arg6[%c0_32, %c0_33, %c0_34], %148 {strides = array<i32>} : memref<2x8x32xf32, #tpu.memory_space<vmem>>, vector<2x8x32xf32>,
    return
  }
  func.func @transform_0(%arg0: i32) -> (i32, i32, i32) {
    %c0_i32 = arith.constant 0 : i32
    %c0_i32_0 = arith.constant 0 : i32
    %c0_i32_1 = arith.constant 0 : i32
    return %arg0, %c0_i32, %c0_i32_0 : i32, i32, i32
  }
  func.func @transform_1(%arg0: i32) -> (i32, i32, i32) {
    %c0_i32 = arith.constant 0 : i32
    %c0_i32_0 = arith.constant 0 : i32
    %c0_i32_1 = arith.constant 0 : i32
    return %arg0, %c0_i32, %c0_i32_0 : i32, i32, i32
  }
  func.func @transform_2(%arg0: i32) -> (i32, i32) {
    %c0_i32 = arith.constant 0 : i32
    %c0_i32_0 = arith.constant 0 : i32
    %c0_i32_1 = arith.constant 0 : i32
    return %c0_i32, %c0_i32_0 : i32, i32
  }
  func.func @transform_3(%arg0: i32) -> (i32, i32) {
    %c0_i32 = arith.constant 0 : i32
    %c0_i32_0 = arith.constant 0 : i32
    %c0_i32_1 = arith.constant 0 : i32
    return %c0_i32, %c0_i32_0 : i32, i32
  }
  func.func @transform_4(%arg0: i32) -> (i32, i32) {
    %c0_i32 = arith.constant 0 : i32
    %c0_i32_0 = arith.constant 0 : i32
    %c0_i32_1 = arith.constant 0 : i32
    return %c0_i32, %c0_i32_0 : i32, i32
  }
  func.func @transform_5(%arg0: i32) -> (i32, i32, i32) {
    %c0_i32 = arith.constant 0 : i32
    %c0_i32_0 = arith.constant 0 : i32
    %c0_i32_1 = arith.constant 0 : i32
    return %arg0, %c0_i32, %c0_i32_0 : i32, i32, i32
  }
}

</mosaic_0001>

<llo_original>
// kernel: _lambda_.1
$region0: #{_lambda_.1}
  #allocation0 [shape = 'u32[]', space=smem, size = 0x4, offset = 0x4, fixed_abs, tag = 'smem constant byte address 0x4 - core index']
  #allocation1 [shape = 'u32[144,128]{1,0:T(1,128)}', space=vmem, size = 0x12000, scoped, tag = 'internal scratch']
  %s0 = inlined_call_operand.vmem [shape: bf16[4,16,32], index: 0, kind: input, shape index: {}]
  %s1 = inlined_call_operand.vmem [shape: bf16[4,8,32], index: 1, kind: input, shape index: {}]
  %s2 = inlined_call_operand.vmem [shape: f32[4,32], index: 2, kind: input, shape index: {}]
  %s3 = inlined_call_operand.vmem [shape: bf16[32,96], index: 3, kind: input, shape index: {}]
  %s4 = inlined_call_operand.vmem [shape: bf16[32,32], index: 4, kind: input, shape index: {}]
  %s5 = inlined_call_operand.hbm [shape: f32[4,8,32], index: 5, kind: output, shape index: {}]
  %s6 = sld [smem:[#allocation0]]
  $region53: #{_lambda_.1} parent=0
    _
  %s8 = ssub.s32 1, %s6
  %s9 = scalar_select 0, %s8, %s6
  $region1: #{_lambda_.1} parent=0
    #allocation2 [shape = 'u8[16384]{0}', space=vmem, size = 0x4000, scoped, tag = 'output window, operand 0']
    #allocation3 [shape = 's32[2]{0}', space=sflag, size = 0x8, scoped, tag = 'scoped memory for _lambda_.1']
    %10 = vsyncpa [#allocation3], 0
    %s11 = scalar_lea.sflag [#allocation3], 1
    %12 = vsyncpa %s11, 0
    loop: start=0, step=1, limit=4
    $region2: #{_lambda_.1} parent=1 // loop_pre_header
      _
    $region3: #{_lambda_.1} parent=1 // loop_header
      %s14 = sphi 0, %s18
      %p15 = scmp.ge.s32.totalorder %s14, 4
      %s24 = sphi 0, %s26
      %s27 = sphi 0, %s24
      %s28 = sphi 0, %s27
      %s44 = sphi 0, %s28
      %s50 = sphi 0, %s52
      %s53 = sphi 0, %s50
      %s54 = sphi 0, %s53
      %s70 = sphi 0, %s54
      %s74 = sphi 0, %s74
      %s76 = sphi 0, %s74
      %s77 = sphi 0, %s76
      %s91 = sphi 0, %s77
      %s95 = sphi 0, %s95
      %s97 = sphi 0, %s95
      %s98 = sphi 0, %s97
      %s112 = sphi 0, %s98
      %s116 = sphi 0, %s116
      %s118 = sphi 0, %s116
      %s119 = sphi 0, %s118
      %s133 = sphi 0, %s119
      %s139 = sphi 0, %s141
      %s142 = sphi 0, %s139
      %s143 = sphi 0, %s142
      %s159 = sphi 0, %s143
    $region4: #{_lambda_.1} parent=1 // loop_header_branch
      %17 = sbr.rel (%p15) target = $region8
    $region5: #{_lambda_.1} parent=1 // loop_body
      %s19 = ssub.s32 %s14, 1
      %s20 = ssub.s32 %s14, 2
      %s21 = sadd.s32 %s14, 1
      %s22 = ssub.s32 %s14, %s21
      %p23 = scmp.eq.s32.totalorder %s22, 0
      %s25 = sadd.s32 %s24, 1
      %s26 = scalar_select %p23, %s24, %s25
      %p29 = pneg %p23
      %p30 = scmp.eq.s32.totalorder %s14, 1
      %p31 = por %p29, %p30
      %p32 = scmp.ne.s32.totalorder %s24, %s27
      %p33 = scmp.eq.s32.totalorder %s14, 0
      %p34 = por %p32, %p33
      %p35 = scmp.ne.s32.totalorder %s24, %s27
      %p36 = scmp.eq.s32.totalorder %s19, 1
      %p37 = por %p35, %p36
      %p38 = scmp.ne.s32.totalorder %s27, %s28
      %p39 = scmp.eq.s32.totalorder %s19, 0
      %p40 = por %p38, %p39
      %p41 = scmp.ne.s32.totalorder %s27, %s28
      %p42 = scmp.eq.s32.totalorder %s20, 1
      %p43 = por %p41, %p42
      %p45 = scmp.ne.s32.totalorder %s28, %s44
      %p46 = scmp.eq.s32.totalorder %s20, 0
      %p47 = por %p45, %p46
      %s48 = ssub.s32 %s14, %s21
      %p49 = scmp.eq.s32.totalorder %s48, 0
      %s51 = sadd.s32 %s50, 1
      %s52 = scalar_select %p49, %s50, %s51
      %p55 = pneg %p49
      %p56 = scmp.eq.s32.totalorder %s14, 1
      %p57 = por %p55, %p56
      %p58 = scmp.ne.s32.totalorder %s50, %s53
      %p59 = scmp.eq.s32.totalorder %s14, 0
      %p60 = por %p58, %p59
      %p61 = scmp.ne.s32.totalorder %s50, %s53
      %p62 = scmp.eq.s32.totalorder %s19, 1
      %p63 = por %p61, %p62
      %p64 = scmp.ne.s32.totalorder %s53, %s54
      %p65 = scmp.eq.s32.totalorder %s19, 0
      %p66 = por %p64, %p65
      %p67 = scmp.ne.s32.totalorder %s53, %s54
      %p68 = scmp.eq.s32.totalorder %s20, 1
      %p69 = por %p67, %p68
      %p71 = scmp.ne.s32.totalorder %s54, %s70
      %p72 = scmp.eq.s32.totalorder %s20, 0
      %p73 = por %p71, %p72
      %s75 = sadd.s32 %s74, 1
      %p78 = scmp.eq.s32.totalorder %s14, 1
      %p79 = scmp.ne.s32.totalorder %s74, %s76
      %p80 = scmp.eq.s32.totalorder %s14, 0
      %p81 = por %p79, %p80
      %p82 = scmp.ne.s32.totalorder %s74, %s76
      %p83 = scmp.eq.s32.totalorder %s19, 1
      %p84 = por %p82, %p83
      %p85 = scmp.ne.s32.totalorder %s76, %s77
      %p86 = scmp.eq.s32.totalorder %s19, 0
      %p87 = por %p85, %p86
      %p88 = scmp.ne.s32.totalorder %s76, %s77
      %p89 = scmp.eq.s32.totalorder %s20, 1
      %p90 = por %p88, %p89
      %p92 = scmp.ne.s32.totalorder %s77, %s91
      %p93 = scmp.eq.s32.totalorder %s20, 0
      %p94 = por %p92, %p93
      %s96 = sadd.s32 %s95, 1
      %p99 = scmp.eq.s32.totalorder %s14, 1
      %p100 = scmp.ne.s32.totalorder %s95, %s97
      %p101 = scmp.eq.s32.totalorder %s14, 0
      %p102 = por %p100, %p101
      %p103 = scmp.ne.s32.totalorder %s95, %s97
      %p104 = scmp.eq.s32.totalorder %s19, 1
      %p105 = por %p103, %p104
      %p106 = scmp.ne.s32.totalorder %s97, %s98
      %p107 = scmp.eq.s32.totalorder %s19, 0
      %p108 = por %p106, %p107
      %p109 = scmp.ne.s32.totalorder %s97, %s98
      %p110 = scmp.eq.s32.totalorder %s20, 1
      %p111 = por %p109, %p110
      %p113 = scmp.ne.s32.totalorder %s98, %s112
      %p114 = scmp.eq.s32.totalorder %s20, 0
      %p115 = por %p113, %p114
      %s117 = sadd.s32 %s116, 1
      %p120 = scmp.eq.s32.totalorder %s14, 1
      %p121 = scmp.ne.s32.totalorder %s116, %s118
      %p122 = scmp.eq.s32.totalorder %s14, 0
      %p123 = por %p121, %p122
      %p124 = scmp.ne.s32.totalorder %s116, %s118
      %p125 = scmp.eq.s32.totalorder %s19, 1
      %p126 = por %p124, %p125
      %p127 = scmp.ne.s32.totalorder %s118, %s119
      %p128 = scmp.eq.s32.totalorder %s19, 0
      %p129 = por %p127, %p128
      %p130 = scmp.ne.s32.totalorder %s118, %s119
      %p131 = scmp.eq.s32.totalorder %s20, 1
      %p132 = por %p130, %p131
      %p134 = scmp.ne.s32.totalorder %s119, %s133
      %p135 = scmp.eq.s32.totalorder %s20, 0
      %p136 = por %p134, %p135
      %s137 = ssub.s32 %s14, %s21
      %p138 = scmp.eq.s32.totalorder %s137, 0
      %s140 = sadd.s32 %s139, 1
      %s141 = scalar_select %p138, %s139, %s140
      %p144 = pneg %p138
      %p145 = scmp.eq.s32.totalorder %s14, 1
      %p146 = por %p144, %p145
      %p147 = scmp.ne.s32.totalorder %s139, %s142
      %p148 = scmp.eq.s32.totalorder %s14, 0
      %p149 = por %p147, %p148
      %p150 = scmp.ne.s32.totalorder %s139, %s142
      %p151 = scmp.eq.s32.totalorder %s19, 1
      %p152 = por %p150, %p151
      %p153 = scmp.ne.s32.totalorder %s142, %s143
      %p154 = scmp.eq.s32.totalorder %s19, 0
      %p155 = por %p153, %p154
      %p156 = scmp.ne.s32.totalorder %s142, %s143
      %p157 = scmp.eq.s32.totalorder %s20, 1
      %p158 = por %p156, %p157
      %p160 = scmp.ne.s32.totalorder %s143, %s159
      %p161 = scmp.eq.s32.totalorder %s20, 0
      %p162 = por %p160, %p161
      %p163 = scmp.le.s32.totalorder 1, %s14
      %p164 = scmp.lt.s32.totalorder %s14, 3
      %p165 = pnand %p163, %p164
      %p166 = pneg %p165
      // Predicated region
      $region9: #{_lambda_.1} parent=5 // pred_check
        _
      $region10: #{_lambda_.1} parent=5 // pred_check_branch
        %168 = sbr.rel (%p165) target = $region12
      $region11: #{_lambda_.1} parent=5 // pred_region
        %s169 = ssub.s32 %s14, 1
        // Predicated region
        $region13: #{_lambda_.1} parent=11 // pred_check
          %p170 = pneg %p87
        $region14: #{_lambda_.1} parent=11 // pred_check_branch
          %172 = sbr.rel (%p170) target = $region16
        $region15: #{_lambda_.1} parent=11 // pred_region
          _
        $region16: #{_lambda_.1} parent=11 // pred_fallthru
          _
        // Predicated region
        $region17: #{_lambda_.1} parent=11 // pred_check
          %p173 = pneg %p108
        $region18: #{_lambda_.1} parent=11 // pred_check_branch
          %175 = sbr.rel (%p173) target = $region20
        $region19: #{_lambda_.1} parent=11 // pred_region
          _
        $region20: #{_lambda_.1} parent=11 // pred_fallthru
          _
        // Predicated region
        $region21: #{_lambda_.1} parent=11 // pred_check
          %p176 = pneg %p129
        $region22: #{_lambda_.1} parent=11 // pred_check_branch
          %178 = sbr.rel (%p176) target = $region24
        $region23: #{_lambda_.1} parent=11 // pred_region
          _
        $region24: #{_lambda_.1} parent=11 // pred_fallthru
          _
      $region12: #{_lambda_.1} parent=5 // pred_fallthru
        _
      %p179 = scmp.lt.s32.totalorder %s14, 2
      // Predicated region
      $region25: #{_lambda_.1} parent=5 // pred_check
        %p180 = pneg %p179
      $region26: #{_lambda_.1} parent=5 // pred_check_branch
        %182 = sbr.rel (%p180) target = $region28
      $region27: #{_lambda_.1} parent=5 // pred_region
        // Predicated region
        $region29: #{_lambda_.1} parent=27 // pred_check
          %p183 = pneg %p34
        $region30: #{_lambda_.1} parent=27 // pred_check_branch
          %185 = sbr.rel (%p183) target = $region32
        $region31: #{_lambda_.1} parent=27 // pred_region
          %s186 = smul.u32 2, %s14
          %p187 = scmp.lt.s32.totalorder %s186, 3
          %s188 = scalar_select %p187, %s186, 3
          %s189 = smul.addr %s188, 2
          %s190 = smul.addr %s189, 4
          %s191 = scalar_lea.vmem %s0, %s190
          %s192 = smul.u32 2, %s14
        $region32: #{_lambda_.1} parent=27 // pred_fallthru
          _
        // Predicated region
        $region33: #{_lambda_.1} parent=27 // pred_check
          %p193 = pneg %p60
        $region34: #{_lambda_.1} parent=27 // pred_check_branch
          %195 = sbr.rel (%p193) target = $region36
        $region35: #{_lambda_.1} parent=27 // pred_region
          %s196 = smul.u32 2, %s14
          %p197 = scmp.lt.s32.totalorder %s196, 3
          %s198 = scalar_select %p197, %s196, 3
          %s199 = smul.addr %s198, 4
          %s200 = scalar_lea.vmem %s1, %s199
          %s201 = smul.u32 2, %s14
        $region36: #{_lambda_.1} parent=27 // pred_fallthru
          _
      $region28: #{_lambda_.1} parent=5 // pred_fallthru
        _
      %p202 = scmp.le.s32.totalorder 1, %s14
      %p203 = scmp.lt.s32.totalorder %s14, 3
      %p204 = pnand %p202, %p203
      %p205 = pneg %p204
      // Predicated region
      $region37: #{_lambda_.1} parent=5 // pred_check
        _
      $region38: #{_lambda_.1} parent=5 // pred_check_branch
        %207 = sbr.rel (%p204) target = $region40
      $region39: #{_lambda_.1} parent=5 // pred_region
        %s208 = ssub.s32 %s14, 1
        %s209 = smul.u32 2, %s19
        %p210 = scmp.lt.s32.totalorder %s209, 3
        %s211 = scalar_select %p210, %s209, 3
        %s212 = smul.addr %s211, 2
        %s213 = smul.addr %s212, 4
        %s214 = scalar_lea.vmem %s0, %s213
        %p215 = pneg %p40
        %p216 = pneg %p37
        %s217 = smul.u32 2, %s19
        %p218 = scmp.lt.s32.totalorder %s217, 3
        %s219 = scalar_select %p218, %s217, 3
        %s220 = smul.addr %s219, 4
        %s221 = scalar_lea.vmem %s1, %s220
        %p222 = pneg %p66
        %p223 = pneg %p63
        %p224 = pneg %p87
        %p225 = pneg %p84
        %p226 = pneg %p108
        %p227 = pneg %p105
        %p228 = pneg %p129
        %p229 = pneg %p126
        %p230 = pneg %p155
        %p231 = pneg %p152
        %s232 = sand.u32 %s142, 1
        %s233 = scalar_lea.sflag [#allocation3], %s232
        %s234 = sand.u32 %s142, 1
        %s235 = smul.addr %s234, 16
        %s236 = scalar_lea.vmem [#allocation2], %s235
        %s237 = smul.u32 2, %s19
        %p238 = scmp.lt.s32.totalorder %s237, 3
        %s239 = scalar_select %p238, %s237, 3
        %s240 = smul.addr %s239, 2
        %s241 = smul.addr %s240, 4
        %s242 = scalar_lea.vmem %s0, %s241
        %s243 = smul.u32 2, %s19
        %s244 = smul.u32 2, %s19
        %p245 = scmp.lt.s32.totalorder %s244, 3
        %s246 = scalar_select %p245, %s244, 3
        %s247 = smul.addr %s246, 4
        %s248 = scalar_lea.vmem %s1, %s247
        %s249 = smul.u32 2, %s19
        %s250 = smul.u32 2, %s19
        %v252 = vld [vmem:[%s242] sm:$0xf]
        %v253 = vld [vmem:[%s242 + $0x4] sm:$0xf]
        %v254 = vld [vmem:[%s242 + $0x8] sm:$0xf]
        %v255 = vld [vmem:[%s242 + $0xc] sm:$0xf]
        %v256 = vunpack.c.l.bf16 %v252
        %v257 = vunpack.c.l.bf16 %v253
        %v258 = vunpack.c.l.bf16 %v254
        %v259 = vunpack.c.l.bf16 %v255
        %v260 = vld [vmem:[%s248] sm:$0xf]
        %v261 = vld [vmem:[%s248 + $0x4] sm:$0xf]
        %v262 = vunpack.c.l.bf16 %v260
        %v263 = vunpack.c.l.bf16 %v261
        %v264 = vld [vmem:[%s2] sm:$0xf]
        %vm265 = vcmask 261120
        %v266 = vsel %vm265, %v256, 0.0
        %267 = vadd.xlane.f32.xlu0 %v266
        %v268 = vpop.xlane.xlu0 %267
        %v269 = vsel %vm265, %v257, 0.0
        %270 = vadd.xlane.f32.xlu0 %v269
        %v271 = vpop.xlane.xlu0 %270
        %v272 = vsel %vm265, %v258, 0.0
        %273 = vadd.xlane.f32.xlu0 %v272
        %v274 = vpop.xlane.xlu0 %273
        %v275 = vsel %vm265, %v259, 0.0
        %276 = vadd.xlane.f32.xlu0 %v275
        %v277 = vpop.xlane.xlu0 %276
        %v278 = vrcp.pop 32.0
        %v279 = vmul.f32 %v268, %v278
        %v280 = vmul.f32 %v271, %v278
        %v281 = vmul.f32 %v274, %v278
        %v282 = vmul.f32 %v277, %v278
        %v283 = vsub.f32 %v256, %v279
        %v284 = vsub.f32 %v257, %v280
        %v285 = vsub.f32 %v258, %v281
        %v286 = vsub.f32 %v259, %v282
        %v287 = vmul.f32 %v283, %v283
        %v288 = vmul.f32 %v284, %v284
        %v289 = vmul.f32 %v285, %v285
        %v290 = vmul.f32 %v286, %v286
        %v291 = vsel %vm265, %v287, 0.0
        %292 = vadd.xlane.f32.xlu0 %v291
        %v293 = vpop.xlane.xlu0 %292
        %v294 = vsel %vm265, %v288, 0.0
        %295 = vadd.xlane.f32.xlu0 %v294
        %v296 = vpop.xlane.xlu0 %295
        %v297 = vsel %vm265, %v289, 0.0
        %298 = vadd.xlane.f32.xlu0 %v297
        %v299 = vpop.xlane.xlu0 %298
        %v300 = vsel %vm265, %v290, 0.0
        %301 = vadd.xlane.f32.xlu0 %v300
        %v302 = vpop.xlane.xlu0 %301
        %v303 = vmul.f32 %v293, %v278
        %v304 = vmul.f32 %v296, %v278
        %v305 = vmul.f32 %v299, %v278
        %v306 = vmul.f32 %v302, %v278
        %v307 = vadd.f32 %v303, 1e-05
        %v308 = vadd.f32 %v304, 1e-05
        %v309 = vadd.f32 %v305, 1e-05
        %v310 = vadd.f32 %v306, 1e-05
        %v311 = vrsqrt.pop %v307
        %v312 = vrsqrt.pop %v308
        %v313 = vrsqrt.pop %v309
        %v314 = vrsqrt.pop %v310
        %v315 = vmul.f32 %v283, %v311
        %v316 = vmul.f32 %v284, %v312
        %v317 = vmul.f32 %v285, %v313
        %v318 = vmul.f32 %v286, %v314
        %v319 = vlaneseq
        %v320 = vshrl.u32 %v319, 7
        %v321 = vsub.s32 0, %v320
        %v322 = vrot.slane %v264, %v321
        %v323 = vmul.f32 %v315, %v322
        %v324 = vmul.f32 %v316, %v322
        %v325 = vmul.f32 %v317, %v322
        %v326 = vmul.f32 %v318, %v322
        %v327 = vlaneseq
        %v328 = vshrl.u32 %v327, 7
        %v329 = vsub.s32 1, %v328
        %v330 = vrot.slane %v264, %v329
        %v331 = vadd.f32 %v323, %v330
        %v332 = vadd.f32 %v324, %v330
        %v333 = vadd.f32 %v325, %v330
        %v334 = vadd.f32 %v326, %v330
        %v335 = vpack.c.bf16 %v332, %v331
        %v336 = vpack.c.bf16 %v334, %v333
        %v337 = vsel %vm265, %v262, 0.0
        %338 = vadd.xlane.f32.xlu0 %v337
        %v339 = vpop.xlane.xlu0 %338
        %v340 = vsel %vm265, %v263, 0.0
        %341 = vadd.xlane.f32.xlu0 %v340
        %v342 = vpop.xlane.xlu0 %341
        %v343 = vmul.f32 %v339, %v278
        %v344 = vmul.f32 %v342, %v278
        %v345 = vsub.f32 %v262, %v343
        %v346 = vsub.f32 %v263, %v344
        %v347 = vmul.f32 %v345, %v345
        %v348 = vmul.f32 %v346, %v346
        %v349 = vsel %vm265, %v347, 0.0
        %350 = vadd.xlane.f32.xlu0 %v349
        %v351 = vpop.xlane.xlu0 %350
        %v352 = vsel %vm265, %v348, 0.0
        %353 = vadd.xlane.f32.xlu0 %v352
        %v354 = vpop.xlane.xlu0 %353
        %v355 = vmul.f32 %v351, %v278
        %v356 = vmul.f32 %v354, %v278
        %v357 = vadd.f32 %v355, 1e-05
        %v358 = vadd.f32 %v356, 1e-05
        %v359 = vrsqrt.pop %v357
        %v360 = vrsqrt.pop %v358
        %v361 = vmul.f32 %v345, %v359
        %v362 = vmul.f32 %v346, %v360
        %v363 = vlaneseq
        %v364 = vshrl.u32 %v363, 7
        %v365 = vsub.s32 2, %v364
        %v366 = vrot.slane %v264, %v365
        %v367 = vmul.f32 %v361, %v366
        %v368 = vmul.f32 %v362, %v366
        %v369 = vlaneseq
        %v370 = vshrl.u32 %v369, 7
        %v371 = vsub.s32 3, %v370
        %v372 = vrot.slane %v264, %v371
        %v373 = vadd.f32 %v367, %v372
        %v374 = vadd.f32 %v368, %v372
        %v375 = vpack.c.bf16 %v374, %v373
        %v376 = vld [vmem:[%s3] sm:$0xf]
        %v377 = vld [vmem:[%s3 + $0x4] sm:$0xf]
        %v378 = vld [vmem:[%s3 + $0x8] sm:$0xf]
        %v379 = vld [vmem:[%s3 + $0xc] sm:$0xf]
        %v384 = vunpack.c.l.b16 %v376
        %v385 = vunpack.c.l.b16 %v377
        %v386 = vunpack.c.l.b16 %v378
        %v387 = vunpack.c.l.b16 %v379
        %v388 = vpack.c.b16 %v385, %v384
        %v389 = vpack.c.b16 %v387, %v386
        %v393 = vsel %vm265, %v375, 0
        %395 = vmatprep.subr.bf16.mxu0 0
        %396 = vmatpush1.bf16.msra.mxu0 %v388
        %397 = vmatprep.subr.bf16.mxu0 0
        %398 = vmatpush1.bf16.msra.mxu0 %v389
        %399 = vmatprep.subr.bf16.mxu0 0
        %400 = vmatpush1.bf16.msra.mxu0 0
        %401 = vmatprep.subr.bf16.mxu0 0
        %402 = vmatpush1.bf16.msra.mxu0 0
        %403 = vmatprep.subr.bf16.mxu0 0
        %404 = vmatpush1.bf16.msra.mxu0 0
        %405 = vmatprep.subr.bf16.mxu0 0
        %406 = vmatpush1.bf16.msra.mxu0 0
        %407 = vmatprep.subr.bf16.mxu0 0
        %408 = vmatpush1.bf16.msra.mxu0 0
        %409 = vmatprep.subr.bf16.mxu0 0
        %410 = vmatpush1.bf16.msra.mxu0 0
        %411 = vmatprep.subr.bf16.mxu0 0
        %412 = vmatpush1.bf16.msra.mxu0 0
        %413 = vmatprep.subr.bf16.mxu0 0
        %414 = vmatpush1.bf16.msra.mxu0 0
        %415 = vmatprep.subr.bf16.mxu0 0
        %416 = vmatpush1.bf16.msra.mxu0 0
        %417 = vmatprep.subr.bf16.mxu0 0
        %418 = vmatpush1.bf16.msra.mxu0 0
        %419 = vmatprep.subr.bf16.mxu0 0
        %420 = vmatpush1.bf16.msra.mxu0 0
        %421 = vmatprep.subr.bf16.mxu0 0
        %422 = vmatpush1.bf16.msra.mxu0 0
        %423 = vmatprep.subr.bf16.mxu0 0
        %424 = vmatpush1.bf16.msra.mxu0 0
        %425 = vmatprep.subr.bf16.mxu0 0
        %426 = vmatpush1.bf16.msra.mxu0 0
        %427 = vmatprep.mubr.bf16.mxu0 0
        %428 = vmatmul.mubr.bf16.gmra.mrb[0].mxu0 %v393
        %v429 = vpop.f32.mrb[0].mxu0
        %v430 = vadd.f32 0.0, %v429
        %v431 = vpop.f32.mrb[0].mxu0
        %v432 = vpop.f32.mrb[0].mxu0
        %v433 = vadd.f32 0.0, %v432
        %v434 = vpop.f32.mrb[0].mxu0
        %435 = vdwg.mxu0
        %v436 = vpack.c.bf16 %v433, %v430
        %437 = vrot.lane.b32.xlu0 %v388, 96
        %v438 = vpop.permute.xlu0 %437
        %439 = vrot.lane.b32.xlu0 %v389, 96
        %v440 = vpop.permute.xlu0 %439
        %v444 = vsel %vm265, %v335, 0
        %v447 = vsel %vm265, %v336, 0
        %449 = vmatprep.subr.bf16.mxu0 0
        %450 = vmatpush1.bf16.msra.mxu0 %v438
        %451 = vmatprep.subr.bf16.mxu0 0
        %452 = vmatpush1.bf16.msra.mxu0 %v440
        %453 = vmatprep.subr.bf16.mxu0 0
        %454 = vmatpush1.bf16.msra.mxu0 0
        %455 = vmatprep.subr.bf16.mxu0 0
        %456 = vmatpush1.bf16.msra.mxu0 0
        %457 = vmatprep.subr.bf16.mxu0 0
        %458 = vmatpush1.bf16.msra.mxu0 0
        %459 = vmatprep.subr.bf16.mxu0 0
        %460 = vmatpush1.bf16.msra.mxu0 0
        %461 = vmatprep.subr.bf16.mxu0 0
        %462 = vmatpush1.bf16.msra.mxu0 0
        %463 = vmatprep.subr.bf16.mxu0 0
        %464 = vmatpush1.bf16.msra.mxu0 0
        %465 = vmatprep.subr.bf16.mxu0 0
        %466 = vmatpush1.bf16.msra.mxu0 0
        %467 = vmatprep.subr.bf16.mxu0 0
        %468 = vmatpush1.bf16.msra.mxu0 0
        %469 = vmatprep.subr.bf16.mxu0 0
        %470 = vmatpush1.bf16.msra.mxu0 0
        %471 = vmatprep.subr.bf16.mxu0 0
        %472 = vmatpush1.bf16.msra.mxu0 0
        %473 = vmatprep.subr.bf16.mxu0 0
        %474 = vmatpush1.bf16.msra.mxu0 0
        %475 = vmatprep.subr.bf16.mxu0 0
        %476 = vmatpush1.bf16.msra.mxu0 0
        %477 = vmatprep.subr.bf16.mxu0 0
        %478 = vmatpush1.bf16.msra.mxu0 0
        %479 = vmatprep.subr.bf16.mxu0 0
        %480 = vmatpush1.bf16.msra.mxu0 0
        %481 = vmatprep.mubr.bf16.mxu0 0
        %482 = vmatmul.mubr.bf16.gmra.mrb[0].mxu0 %v444
        %v483 = vpop.f32.mrb[0].mxu0
        %v484 = vadd.f32 0.0, %v483
        %v485 = vpop.f32.mrb[0].mxu0
        %v486 = vpop.f32.mrb[0].mxu0
        %v487 = vadd.f32 0.0, %v486
        %v488 = vpop.f32.mrb[0].mxu0
        %489 = vmatprep.mubr.bf16.mxu0 0
        %490 = vmatmul.mubr.bf16.gmra.mrb[0].mxu0 %v447
        %v491 = vpop.f32.mrb[0].mxu0
        %v492 = vadd.f32 0.0, %v491
        %v493 = vpop.f32.mrb[0].mxu0
        %v494 = vpop.f32.mrb[0].mxu0
        %v495 = vadd.f32 0.0, %v494
        %v496 = vpop.f32.mrb[0].mxu0
        %497 = vdwg.mxu0
        %v498 = vpack.c.bf16 %v487, %v484
        %v499 = vpack.c.bf16 %v495, %v492
        %v501 = vunpack.c.l.b16 %v436
        %v502 = vunpack.c.h.b16 %v436
        %v503 = vpack.c.b16 %v501, %v501
        %v504 = vpack.c.b16 %v502, %v502
        %505 = vrot.lane.b32.xlu0 %v503, 120
        %v506 = vpop.permute.xlu0 %505
        %507 = vrot.lane.b32.xlu0 %v504, 120
        %v508 = vpop.permute.xlu0 %507
        %509 = vrot.lane.b32.xlu0 %v503, 112
        %v510 = vpop.permute.xlu0 %509
        %511 = vrot.lane.b32.xlu0 %v504, 112
        %v512 = vpop.permute.xlu0 %511
        %513 = vrot.lane.b32.xlu0 %v503, 104
        %v514 = vpop.permute.xlu0 %513
        %515 = vrot.lane.b32.xlu0 %v504, 104
        %v516 = vpop.permute.xlu0 %515
        %519 = vrot.lane.b32.xlu0 %v498, 120
        %v520 = vpop.permute.xlu0 %519
        %521 = vrot.lane.b32.xlu0 %v499, 120
        %v522 = vpop.permute.xlu0 %521
        %523 = vrot.lane.b32.xlu0 %v498, 112
        %v524 = vpop.permute.xlu0 %523
        %525 = vrot.lane.b32.xlu0 %v499, 112
        %v526 = vpop.permute.xlu0 %525
        %527 = vrot.lane.b32.xlu0 %v498, 104
        %v528 = vpop.permute.xlu0 %527
        %529 = vrot.lane.b32.xlu0 %v499, 104
        %v530 = vpop.permute.xlu0 %529
        %vm531 = vcmask 64512
        %v533 = vsel %vm531, %v503, 0
        %v536 = vsel %vm531, %v498, 0
        %538 = vmatprep.subr.bf16.mxu0 0
        %539 = vmatpush1.bf16.xpose.msra.mxu0 %v536
        %540 = vmatprep.subr.bf16.mxu0 0
        %541 = vmatpush1.bf16.xpose.msra.mxu0 0
        %542 = vmatprep.subr.bf16.mxu0 0
        %543 = vmatpush1.bf16.xpose.msra.mxu0 0
        %544 = vmatprep.subr.bf16.mxu0 0
        %545 = vmatpush1.bf16.xpose.msra.mxu0 0
        %546 = vmatprep.subr.bf16.mxu0 0
        %547 = vmatpush1.bf16.xpose.msra.mxu0 0
        %548 = vmatprep.subr.bf16.mxu0 0
        %549 = vmatpush1.bf16.xpose.msra.mxu0 0
        %550 = vmatprep.subr.bf16.mxu0 0
        %551 = vmatpush1.bf16.xpose.msra.mxu0 0
        %552 = vmatprep.subr.bf16.mxu0 0
        %553 = vmatpush1.bf16.xpose.msra.mxu0 0
        %554 = vmatprep.subr.bf16.mxu0 0
        %555 = vmatpush1.bf16.xpose.msra.mxu0 0
        %556 = vmatprep.subr.bf16.mxu0 0
        %557 = vmatpush1.bf16.xpose.msra.mxu0 0
        %558 = vmatprep.subr.bf16.mxu0 0
        %559 = vmatpush1.bf16.xpose.msra.mxu0 0
        %560 = vmatprep.subr.bf16.mxu0 0
        %561 = vmatpush1.bf16.xpose.msra.mxu0 0
        %562 = vmatprep.subr.bf16.mxu0 0
        %563 = vmatpush1.bf16.xpose.msra.mxu0 0
        %564 = vmatprep.subr.bf16.mxu0 0
        %565 = vmatpush1.bf16.xpose.msra.mxu0 0
        %566 = vmatprep.subr.bf16.mxu0 0
        %567 = vmatpush1.bf16.xpose.msra.mxu0 0
        %568 = vmatprep.subr.bf16.mxu0 0
        %569 = vmatpush1.bf16.xpose.msra.mxu0 0
        %570 = vmatprep.mubr.bf16.mxu0 0
        %571 = vmatmul.mubr.bf16.gmra.mrb[0].mxu0 %v533
        %v572 = vpop.f32.mrb[0].mxu0
        %v573 = vadd.f32 0.0, %v572
        %v574 = vpop.f32.mrb[0].mxu0
        %v575 = vpop.f32.mrb[0].mxu0
        %v576 = vpop.f32.mrb[0].mxu0
        %577 = vdwg.mxu0
        %v579 = vsel %vm531, %v504, 0
        %v582 = vsel %vm531, %v499, 0
        %584 = vmatprep.subr.bf16.mxu0 0
        %585 = vmatpush1.bf16.xpose.msra.mxu0 %v582
        %586 = vmatprep.subr.bf16.mxu0 0
        %587 = vmatpush1.bf16.xpose.msra.mxu0 0
        %588 = vmatprep.subr.bf16.mxu0 0
        %589 = vmatpush1.bf16.xpose.msra.mxu0 0
        %590 = vmatprep.subr.bf16.mxu0 0
        %591 = vmatpush1.bf16.xpose.msra.mxu0 0
        %592 = vmatprep.subr.bf16.mxu0 0
        %593 = vmatpush1.bf16.xpose.msra.mxu0 0
        %594 = vmatprep.subr.bf16.mxu0 0
        %595 = vmatpush1.bf16.xpose.msra.mxu0 0
        %596 = vmatprep.subr.bf16.mxu0 0
        %597 = vmatpush1.bf16.xpose.msra.mxu0 0
        %598 = vmatprep.subr.bf16.mxu0 0
        %599 = vmatpush1.bf16.xpose.msra.mxu0 0
        %600 = vmatprep.subr.bf16.mxu0 0
        %601 = vmatpush1.bf16.xpose.msra.mxu0 0
        %602 = vmatprep.subr.bf16.mxu0 0
        %603 = vmatpush1.bf16.xpose.msra.mxu0 0
        %604 = vmatprep.subr.bf16.mxu0 0
        %605 = vmatpush1.bf16.xpose.msra.mxu0 0
        %606 = vmatprep.subr.bf16.mxu0 0
        %607 = vmatpush1.bf16.xpose.msra.mxu0 0
        %608 = vmatprep.subr.bf16.mxu0 0
        %609 = vmatpush1.bf16.xpose.msra.mxu0 0
        %610 = vmatprep.subr.bf16.mxu0 0
        %611 = vmatpush1.bf16.xpose.msra.mxu0 0
        %612 = vmatprep.subr.bf16.mxu0 0
        %613 = vmatpush1.bf16.xpose.msra.mxu0 0
        %614 = vmatprep.subr.bf16.mxu0 0
        %615 = vmatpush1.bf16.xpose.msra.mxu0 0
        %616 = vmatprep.mubr.bf16.mxu0 0
        %617 = vmatmul.mubr.bf16.gmra.mrb[0].mxu0 %v579
        %v618 = vpop.f32.mrb[0].mxu0
        %v619 = vadd.f32 0.0, %v618
        %v620 = vpop.f32.mrb[0].mxu0
        %v621 = vpop.f32.mrb[0].mxu0
        %v622 = vpop.f32.mrb[0].mxu0
        %623 = vdwg.mxu0
        %v625 = vsel %vm531, %v506, 0
        %v628 = vsel %vm531, %v520, 0
        %630 = vmatprep.subr.bf16.mxu0 0
        %631 = vmatpush1.bf16.xpose.msra.mxu0 %v628
        %632 = vmatprep.subr.bf16.mxu0 0
        %633 = vmatpush1.bf16.xpose.msra.mxu0 0
        %634 = vmatprep.subr.bf16.mxu0 0
        %635 = vmatpush1.bf16.xpose.msra.mxu0 0
        %636 = vmatprep.subr.bf16.mxu0 0
        %637 = vmatpush1.bf16.xpose.msra.mxu0 0
        %638 = vmatprep.subr.bf16.mxu0 0
        %639 = vmatpush1.bf16.xpose.msra.mxu0 0
        %640 = vmatprep.subr.bf16.mxu0 0
        %641 = vmatpush1.bf16.xpose.msra.mxu0 0
        %642 = vmatprep.subr.bf16.mxu0 0
        %643 = vmatpush1.bf16.xpose.msra.mxu0 0
        %644 = vmatprep.subr.bf16.mxu0 0
        %645 = vmatpush1.bf16.xpose.msra.mxu0 0
        %646 = vmatprep.subr.bf16.mxu0 0
        %647 = vmatpush1.bf16.xpose.msra.mxu0 0
        %648 = vmatprep.subr.bf16.mxu0 0
        %649 = vmatpush1.bf16.xpose.msra.mxu0 0
        %650 = vmatprep.subr.bf16.mxu0 0
        %651 = vmatpush1.bf16.xpose.msra.mxu0 0
        %652 = vmatprep.subr.bf16.mxu0 0
        %653 = vmatpush1.bf16.xpose.msra.mxu0 0
        %654 = vmatprep.subr.bf16.mxu0 0
        %655 = vmatpush1.bf16.xpose.msra.mxu0 0
        %656 = vmatprep.subr.bf16.mxu0 0
        %657 = vmatpush1.bf16.xpose.msra.mxu0 0
        %658 = vmatprep.subr.bf16.mxu0 0
        %659 = vmatpush1.bf16.xpose.msra.mxu0 0
        %660 = vmatprep.subr.bf16.mxu0 0
        %661 = vmatpush1.bf16.xpose.msra.mxu0 0
        %662 = vmatprep.mubr.bf16.mxu0 0
        %663 = vmatmul.mubr.bf16.gmra.mrb[0].mxu0 %v625
        %v664 = vpop.f32.mrb[0].mxu0
        %v665 = vadd.f32 0.0, %v664
        %v666 = vpop.f32.mrb[0].mxu0
        %v667 = vpop.f32.mrb[0].mxu0
        %v668 = vpop.f32.mrb[0].mxu0
        %669 = vdwg.mxu0
        %v671 = vsel %vm531, %v508, 0
        %v674 = vsel %vm531, %v522, 0
        %676 = vmatprep.subr.bf16.mxu0 0
        %677 = vmatpush1.bf16.xpose.msra.mxu0 %v674
        %678 = vmatprep.subr.bf16.mxu0 0
        %679 = vmatpush1.bf16.xpose.msra.mxu0 0
        %680 = vmatprep.subr.bf16.mxu0 0
        %681 = vmatpush1.bf16.xpose.msra.mxu0 0
        %682 = vmatprep.subr.bf16.mxu0 0
        %683 = vmatpush1.bf16.xpose.msra.mxu0 0
        %684 = vmatprep.subr.bf16.mxu0 0
        %685 = vmatpush1.bf16.xpose.msra.mxu0 0
        %686 = vmatprep.subr.bf16.mxu0 0
        %687 = vmatpush1.bf16.xpose.msra.mxu0 0
        %688 = vmatprep.subr.bf16.mxu0 0
        %689 = vmatpush1.bf16.xpose.msra.mxu0 0
        %690 = vmatprep.subr.bf16.mxu0 0
        %691 = vmatpush1.bf16.xpose.msra.mxu0 0
        %692 = vmatprep.subr.bf16.mxu0 0
        %693 = vmatpush1.bf16.xpose.msra.mxu0 0
        %694 = vmatprep.subr.bf16.mxu0 0
        %695 = vmatpush1.bf16.xpose.msra.mxu0 0
        %696 = vmatprep.subr.bf16.mxu0 0
        %697 = vmatpush1.bf16.xpose.msra.mxu0 0
        %698 = vmatprep.subr.bf16.mxu0 0
        %699 = vmatpush1.bf16.xpose.msra.mxu0 0
        %700 = vmatprep.subr.bf16.mxu0 0
        %701 = vmatpush1.bf16.xpose.msra.mxu0 0
        %702 = vmatprep.subr.bf16.mxu0 0
        %703 = vmatpush1.bf16.xpose.msra.mxu0 0
        %704 = vmatprep.subr.bf16.mxu0 0
        %705 = vmatpush1.bf16.xpose.msra.mxu0 0
        %706 = vmatprep.subr.bf16.mxu0 0
        %707 = vmatpush1.bf16.xpose.msra.mxu0 0
        %708 = vmatprep.mubr.bf16.mxu0 0
        %709 = vmatmul.mubr.bf16.gmra.mrb[0].mxu0 %v671
        %v710 = vpop.f32.mrb[0].mxu0
        %v711 = vadd.f32 0.0, %v710
        %v712 = vpop.f32.mrb[0].mxu0
        %v713 = vpop.f32.mrb[0].mxu0
        %v714 = vpop.f32.mrb[0].mxu0
        %715 = vdwg.mxu0
        %v717 = vsel %vm531, %v510, 0
        %v720 = vsel %vm531, %v524, 0
        %722 = vmatprep.subr.bf16.mxu0 0
        %723 = vmatpush1.bf16.xpose.msra.mxu0 %v720
        %724 = vmatprep.subr.bf16.mxu0 0
        %725 = vmatpush1.bf16.xpose.msra.mxu0 0
        %726 = vmatprep.subr.bf16.mxu0 0
        %727 = vmatpush1.bf16.xpose.msra.mxu0 0
        %728 = vmatprep.subr.bf16.mxu0 0
        %729 = vmatpush1.bf16.xpose.msra.mxu0 0
        %730 = vmatprep.subr.bf16.mxu0 0
        %731 = vmatpush1.bf16.xpose.msra.mxu0 0
        %732 = vmatprep.subr.bf16.mxu0 0
        %733 = vmatpush1.bf16.xpose.msra.mxu0 0
        %734 = vmatprep.subr.bf16.mxu0 0
        %735 = vmatpush1.bf16.xpose.msra.mxu0 0
        %736 = vmatprep.subr.bf16.mxu0 0
        %737 = vmatpush1.bf16.xpose.msra.mxu0 0
        %738 = vmatprep.subr.bf16.mxu0 0
        %739 = vmatpush1.bf16.xpose.msra.mxu0 0
        %740 = vmatprep.subr.bf16.mxu0 0
        %741 = vmatpush1.bf16.xpose.msra.mxu0 0
        %742 = vmatprep.subr.bf16.mxu0 0
        %743 = vmatpush1.bf16.xpose.msra.mxu0 0
        %744 = vmatprep.subr.bf16.mxu0 0
        %745 = vmatpush1.bf16.xpose.msra.mxu0 0
        %746 = vmatprep.subr.bf16.mxu0 0
        %747 = vmatpush1.bf16.xpose.msra.mxu0 0
        %748 = vmatprep.subr.bf16.mxu0 0
        %749 = vmatpush1.bf16.xpose.msra.mxu0 0
        %750 = vmatprep.subr.bf16.mxu0 0
        %751 = vmatpush1.bf16.xpose.msra.mxu0 0
        %752 = vmatprep.subr.bf16.mxu0 0
        %753 = vmatpush1.bf16.xpose.msra.mxu0 0
        %754 = vmatprep.mubr.bf16.mxu0 0
        %755 = vmatmul.mubr.bf16.gmra.mrb[0].mxu0 %v717
        %v756 = vpop.f32.mrb[0].mxu0
        %v757 = vadd.f32 0.0, %v756
        %v758 = vpop.f32.mrb[0].mxu0
        %v759 = vpop.f32.mrb[0].mxu0
        %v760 = vpop.f32.mrb[0].mxu0
        %761 = vdwg.mxu0
        %v763 = vsel %vm531, %v512, 0
        %v766 = vsel %vm531, %v526, 0
        %768 = vmatprep.subr.bf16.mxu0 0
        %769 = vmatpush1.bf16.xpose.msra.mxu0 %v766
        %770 = vmatprep.subr.bf16.mxu0 0
        %771 = vmatpush1.bf16.xpose.msra.mxu0 0
        %772 = vmatprep.subr.bf16.mxu0 0
        %773 = vmatpush1.bf16.xpose.msra.mxu0 0
        %774 = vmatprep.subr.bf16.mxu0 0
        %775 = vmatpush1.bf16.xpose.msra.mxu0 0
        %776 = vmatprep.subr.bf16.mxu0 0
        %777 = vmatpush1.bf16.xpose.msra.mxu0 0
        %778 = vmatprep.subr.bf16.mxu0 0
        %779 = vmatpush1.bf16.xpose.msra.mxu0 0
        %780 = vmatprep.subr.bf16.mxu0 0
        %781 = vmatpush1.bf16.xpose.msra.mxu0 0
        %782 = vmatprep.subr.bf16.mxu0 0
        %783 = vmatpush1.bf16.xpose.msra.mxu0 0
        %784 = vmatprep.subr.bf16.mxu0 0
        %785 = vmatpush1.bf16.xpose.msra.mxu0 0
        %786 = vmatprep.subr.bf16.mxu0 0
        %787 = vmatpush1.bf16.xpose.msra.mxu0 0
        %788 = vmatprep.subr.bf16.mxu0 0
        %789 = vmatpush1.bf16.xpose.msra.mxu0 0
        %790 = vmatprep.subr.bf16.mxu0 0
        %791 = vmatpush1.bf16.xpose.msra.mxu0 0
        %792 = vmatprep.subr.bf16.mxu0 0
        %793 = vmatpush1.bf16.xpose.msra.mxu0 0
        %794 = vmatprep.subr.bf16.mxu0 0
        %795 = vmatpush1.bf16.xpose.msra.mxu0 0
        %796 = vmatprep.subr.bf16.mxu0 0
        %797 = vmatpush1.bf16.xpose.msra.mxu0 0
        %798 = vmatprep.subr.bf16.mxu0 0
        %799 = vmatpush1.bf16.xpose.msra.mxu0 0
        %800 = vmatprep.mubr.bf16.mxu0 0
        %801 = vmatmul.mubr.bf16.gmra.mrb[0].mxu0 %v763
        %v802 = vpop.f32.mrb[0].mxu0
        %v803 = vadd.f32 0.0, %v802
        %v804 = vpop.f32.mrb[0].mxu0
        %v805 = vpop.f32.mrb[0].mxu0
        %v806 = vpop.f32.mrb[0].mxu0
        %807 = vdwg.mxu0
        %v809 = vsel %vm531, %v514, 0
        %v812 = vsel %vm531, %v528, 0
        %814 = vmatprep.subr.bf16.mxu0 0
        %815 = vmatpush1.bf16.xpose.msra.mxu0 %v812
        %816 = vmatprep.subr.bf16.mxu0 0
        %817 = vmatpush1.bf16.xpose.msra.mxu0 0
        %818 = vmatprep.subr.bf16.mxu0 0
        %819 = vmatpush1.bf16.xpose.msra.mxu0 0
        %820 = vmatprep.subr.bf16.mxu0 0
        %821 = vmatpush1.bf16.xpose.msra.mxu0 0
        %822 = vmatprep.subr.bf16.mxu0 0
        %823 = vmatpush1.bf16.xpose.msra.mxu0 0
        %824 = vmatprep.subr.bf16.mxu0 0
        %825 = vmatpush1.bf16.xpose.msra.mxu0 0
        %826 = vmatprep.subr.bf16.mxu0 0
        %827 = vmatpush1.bf16.xpose.msra.mxu0 0
        %828 = vmatprep.subr.bf16.mxu0 0
        %829 = vmatpush1.bf16.xpose.msra.mxu0 0
        %830 = vmatprep.subr.bf16.mxu0 0
        %831 = vmatpush1.bf16.xpose.msra.mxu0 0
        %832 = vmatprep.subr.bf16.mxu0 0
        %833 = vmatpush1.bf16.xpose.msra.mxu0 0
        %834 = vmatprep.subr.bf16.mxu0 0
        %835 = vmatpush1.bf16.xpose.msra.mxu0 0
        %836 = vmatprep.subr.bf16.mxu0 0
        %837 = vmatpush1.bf16.xpose.msra.mxu0 0
        %838 = vmatprep.subr.bf16.mxu0 0
        %839 = vmatpush1.bf16.xpose.msra.mxu0 0
        %840 = vmatprep.subr.bf16.mxu0 0
        %841 = vmatpush1.bf16.xpose.msra.mxu0 0
        %842 = vmatprep.subr.bf16.mxu0 0
        %843 = vmatpush1.bf16.xpose.msra.mxu0 0
        %844 = vmatprep.subr.bf16.mxu0 0
        %845 = vmatpush1.bf16.xpose.msra.mxu0 0
        %846 = vmatprep.mubr.bf16.mxu0 0
        %847 = vmatmul.mubr.bf16.gmra.mrb[0].mxu0 %v809
        %v848 = vpop.f32.mrb[0].mxu0
        %v849 = vadd.f32 0.0, %v848
        %v850 = vpop.f32.mrb[0].mxu0
        %v851 = vpop.f32.mrb[0].mxu0
        %v852 = vpop.f32.mrb[0].mxu0
        %853 = vdwg.mxu0
        %v855 = vsel %vm531, %v516, 0
        %v858 = vsel %vm531, %v530, 0
        %860 = vmatprep.subr.bf16.mxu0 0
        %861 = vmatpush1.bf16.xpose.msra.mxu0 %v858
        %862 = vmatprep.subr.bf16.mxu0 0
        %863 = vmatpush1.bf16.xpose.msra.mxu0 0
        %864 = vmatprep.subr.bf16.mxu0 0
        %865 = vmatpush1.bf16.xpose.msra.mxu0 0
        %866 = vmatprep.subr.bf16.mxu0 0
        %867 = vmatpush1.bf16.xpose.msra.mxu0 0
        %868 = vmatprep.subr.bf16.mxu0 0
        %869 = vmatpush1.bf16.xpose.msra.mxu0 0
        %870 = vmatprep.subr.bf16.mxu0 0
        %871 = vmatpush1.bf16.xpose.msra.mxu0 0
        %872 = vmatprep.subr.bf16.mxu0 0
        %873 = vmatpush1.bf16.xpose.msra.mxu0 0
        %874 = vmatprep.subr.bf16.mxu0 0
        %875 = vmatpush1.bf16.xpose.msra.mxu0 0
        %876 = vmatprep.subr.bf16.mxu0 0
        %877 = vmatpush1.bf16.xpose.msra.mxu0 0
        %878 = vmatprep.subr.bf16.mxu0 0
        %879 = vmatpush1.bf16.xpose.msra.mxu0 0
        %880 = vmatprep.subr.bf16.mxu0 0
        %881 = vmatpush1.bf16.xpose.msra.mxu0 0
        %882 = vmatprep.subr.bf16.mxu0 0
        %883 = vmatpush1.bf16.xpose.msra.mxu0 0
        %884 = vmatprep.subr.bf16.mxu0 0
        %885 = vmatpush1.bf16.xpose.msra.mxu0 0
        %886 = vmatprep.subr.bf16.mxu0 0
        %887 = vmatpush1.bf16.xpose.msra.mxu0 0
        %888 = vmatprep.subr.bf16.mxu0 0
        %889 = vmatpush1.bf16.xpose.msra.mxu0 0
        %890 = vmatprep.subr.bf16.mxu0 0
        %891 = vmatpush1.bf16.xpose.msra.mxu0 0
        %892 = vmatprep.mubr.bf16.mxu0 0
        %893 = vmatmul.mubr.bf16.gmra.mrb[0].mxu0 %v855
        %v894 = vpop.f32.mrb[0].mxu0
        %v895 = vadd.f32 0.0, %v894
        %v896 = vpop.f32.mrb[0].mxu0
        %v897 = vpop.f32.mrb[0].mxu0
        %v898 = vpop.f32.mrb[0].mxu0
        %899 = vdwg.mxu0
        %900 = vrot.lane.b32.xlu0 %v503, 96
        %v901 = vpop.permute.xlu0 %900
        %v903 = vsel %vm531, %v901, 0
        %905 = vmatprep.subr.bf16.mxu0 0
        %906 = vmatpush1.bf16.xpose.msra.mxu0 %v903
        %907 = vmatprep.subr.bf16.mxu0 0
        %908 = vmatpush1.bf16.xpose.msra.mxu0 0
        %909 = vmatprep.subr.bf16.mxu0 0
        %910 = vmatpush1.bf16.xpose.msra.mxu0 0
        %911 = vmatprep.subr.bf16.mxu0 0
        %912 = vmatpush1.bf16.xpose.msra.mxu0 0
        %913 = vmatprep.subr.bf16.mxu0 0
        %914 = vmatpush1.bf16.xpose.msra.mxu0 0
        %915 = vmatprep.subr.bf16.mxu0 0
        %916 = vmatpush1.bf16.xpose.msra.mxu0 0
        %917 = vmatprep.subr.bf16.mxu0 0
        %918 = vmatpush1.bf16.xpose.msra.mxu0 0
        %919 = vmatprep.subr.bf16.mxu0 0
        %920 = vmatpush1.bf16.xpose.msra.mxu0 0
        %921 = vmatprep.subr.bf16.mxu0 0
        %922 = vmatpush1.bf16.xpose.msra.mxu0 0
        %923 = vmatprep.subr.bf16.mxu0 0
        %924 = vmatpush1.bf16.xpose.msra.mxu0 0
        %925 = vmatprep.subr.bf16.mxu0 0
        %926 = vmatpush1.bf16.xpose.msra.mxu0 0
        %927 = vmatprep.subr.bf16.mxu0 0
        %928 = vmatpush1.bf16.xpose.msra.mxu0 0
        %929 = vmatprep.subr.bf16.mxu0 0
        %930 = vmatpush1.bf16.xpose.msra.mxu0 0
        %931 = vmatprep.subr.bf16.mxu0 0
        %932 = vmatpush1.bf16.xpose.msra.mxu0 0
        %933 = vmatprep.subr.bf16.mxu0 0
        %934 = vmatpush1.bf16.xpose.msra.mxu0 0
        %935 = vmatprep.subr.bf16.mxu0 0
        %936 = vmatpush1.bf16.xpose.msra.mxu0 0
        %937 = vmatprep.mubr.bf16.mxu0 0
        %938 = vmatmul.mubr.bf16.gmra.mrb[0].mxu0 %v533
        %v939 = vpop.f32.mrb[0].mxu0
        %v940 = vadd.f32 0.0, %v939
        %v941 = vpop.f32.mrb[0].mxu0
        %v942 = vpop.f32.mrb[0].mxu0
        %v943 = vpop.f32.mrb[0].mxu0
        %944 = vdwg.mxu0
        %945 = vrot.lane.b32.xlu0 %v504, 96
        %v946 = vpop.permute.xlu0 %945
        %v948 = vsel %vm531, %v946, 0
        %950 = vmatprep.subr.bf16.mxu0 0
        %951 = vmatpush1.bf16.xpose.msra.mxu0 %v948
        %952 = vmatprep.subr.bf16.mxu0 0
        %953 = vmatpush1.bf16.xpose.msra.mxu0 0
        %954 = vmatprep.subr.bf16.mxu0 0
        %955 = vmatpush1.bf16.xpose.msra.mxu0 0
        %956 = vmatprep.subr.bf16.mxu0 0
        %957 = vmatpush1.bf16.xpose.msra.mxu0 0
        %958 = vmatprep.subr.bf16.mxu0 0
        %959 = vmatpush1.bf16.xpose.msra.mxu0 0
        %960 = vmatprep.subr.bf16.mxu0 0
        %961 = vmatpush1.bf16.xpose.msra.mxu0 0
        %962 = vmatprep.subr.bf16.mxu0 0
        %963 = vmatpush1.bf16.xpose.msra.mxu0 0
        %964 = vmatprep.subr.bf16.mxu0 0
        %965 = vmatpush1.bf16.xpose.msra.mxu0 0
        %966 = vmatprep.subr.bf16.mxu0 0
        %967 = vmatpush1.bf16.xpose.msra.mxu0 0
        %968 = vmatprep.subr.bf16.mxu0 0
        %969 = vmatpush1.bf16.xpose.msra.mxu0 0
        %970 = vmatprep.subr.bf16.mxu0 0
        %971 = vmatpush1.bf16.xpose.msra.mxu0 0
        %972 = vmatprep.subr.bf16.mxu0 0
        %973 = vmatpush1.bf16.xpose.msra.mxu0 0
        %974 = vmatprep.subr.bf16.mxu0 0
        %975 = vmatpush1.bf16.xpose.msra.mxu0 0
        %976 = vmatprep.subr.bf16.mxu0 0
        %977 = vmatpush1.bf16.xpose.msra.mxu0 0
        %978 = vmatprep.subr.bf16.mxu0 0
        %979 = vmatpush1.bf16.xpose.msra.mxu0 0
        %980 = vmatprep.subr.bf16.mxu0 0
        %981 = vmatpush1.bf16.xpose.msra.mxu0 0
        %982 = vmatprep.mubr.bf16.mxu0 0
        %983 = vmatmul.mubr.bf16.gmra.mrb[0].mxu0 %v579
        %v984 = vpop.f32.mrb[0].mxu0
        %v985 = vadd.f32 0.0, %v984
        %v986 = vpop.f32.mrb[0].mxu0
        %v987 = vpop.f32.mrb[0].mxu0
        %v988 = vpop.f32.mrb[0].mxu0
        %989 = vdwg.mxu0
        %v990 = vunpack.c.l.b16 %v506
        %v991 = vpack.c.b16 %v990, %v990
        %992 = vrot.lane.b32.xlu0 %v991, 96
        %v993 = vpop.permute.xlu0 %992
        %v995 = vsel %vm531, %v993, 0
        %997 = vmatprep.subr.bf16.mxu0 0
        %998 = vmatpush1.bf16.xpose.msra.mxu0 %v995
        %999 = vmatprep.subr.bf16.mxu0 0
        %1000 = vmatpush1.bf16.xpose.msra.mxu0 0
        %1001 = vmatprep.subr.bf16.mxu0 0
        %1002 = vmatpush1.bf16.xpose.msra.mxu0 0
        %1003 = vmatprep.subr.bf16.mxu0 0
        %1004 = vmatpush1.bf16.xpose.msra.mxu0 0
        %1005 = vmatprep.subr.bf16.mxu0 0
        %1006 = vmatpush1.bf16.xpose.msra.mxu0 0
        %1007 = vmatprep.subr.bf16.mxu0 0
        %1008 = vmatpush1.bf16.xpose.msra.mxu0 0
        %1009 = vmatprep.subr.bf16.mxu0 0
        %1010 = vmatpush1.bf16.xpose.msra.mxu0 0
        %1011 = vmatprep.subr.bf16.mxu0 0
        %1012 = vmatpush1.bf16.xpose.msra.mxu0 0
        %1013 = vmatprep.subr.bf16.mxu0 0
        %1014 = vmatpush1.bf16.xpose.msra.mxu0 0
        %1015 = vmatprep.subr.bf16.mxu0 0
        %1016 = vmatpush1.bf16.xpose.msra.mxu0 0
        %1017 = vmatprep.subr.bf16.mxu0 0
        %1018 = vmatpush1.bf16.xpose.msra.mxu0 0
        %1019 = vmatprep.subr.bf16.mxu0 0
        %1020 = vmatpush1.bf16.xpose.msra.mxu0 0
        %1021 = vmatprep.subr.bf16.mxu0 0
        %1022 = vmatpush1.bf16.xpose.msra.mxu0 0
        %1023 = vmatprep.subr.bf16.mxu0 0
        %1024 = vmatpush1.bf16.xpose.msra.mxu0 0
        %1025 = vmatprep.subr.bf16.mxu0 0
        %1026 = vmatpush1.bf16.xpose.msra.mxu0 0
        %1027 = vmatprep.subr.bf16.mxu0 0
        %1028 = vmatpush1.bf16.xpose.msra.mxu0 0
        %1029 = vmatprep.mubr.bf16.mxu0 0
        %1030 = vmatmul.mubr.bf16.gmra.mrb[0].mxu0 %v625
        %v1031 = vpop.f32.mrb[0].mxu0
        %v1032 = vadd.f32 0.0, %v1031
        %v1033 = vpop.f32.mrb[0].mxu0
        %v1034 = vpop.f32.mrb[0].mxu0
        %v1035 = vpop.f32.mrb[0].mxu0
        %1036 = vdwg.mxu0
        %v1037 = vunpack.c.l.b16 %v508
        %v1038 = vpack.c.b16 %v1037, %v1037
        %1039 = vrot.lane.b32.xlu0 %v1038, 96
        %v1040 = vpop.permute.xlu0 %1039
        %v1042 = vsel %vm531, %v1040, 0
        %1044 = vmatprep.subr.bf16.mxu0 0
        %1045 = vmatpush1.bf16.xpose.msra.mxu0 %v1042
        %1046 = vmatprep.subr.bf16.mxu0 0
        %1047 = vmatpush1.bf16.xpose.msra.mxu0 0
        %1048 = vmatprep.subr.bf16.mxu0 0
        %1049 = vmatpush1.bf16.xpose.msra.mxu0 0
        %1050 = vmatprep.subr.bf16.mxu0 0
        %1051 = vmatpush1.bf16.xpose.msra.mxu0 0
        %1052 = vmatprep.subr.bf16.mxu0 0
        %1053 = vmatpush1.bf16.xpose.msra.mxu0 0
        %1054 = vmatprep.subr.bf16.mxu0 0
        %1055 = vmatpush1.bf16.xpose.msra.mxu0 0
        %1056 = vmatprep.subr.bf16.mxu0 0
        %1057 = vmatpush1.bf16.xpose.msra.mxu0 0
        %1058 = vmatprep.subr.bf16.mxu0 0
        %1059 = vmatpush1.bf16.xpose.msra.mxu0 0
        %1060 = vmatprep.subr.bf16.mxu0 0
        %1061 = vmatpush1.bf16.xpose.msra.mxu0 0
        %1062 = vmatprep.subr.bf16.mxu0 0
        %1063 = vmatpush1.bf16.xpose.msra.mxu0 0
        %1064 = vmatprep.subr.bf16.mxu0 0
        %1065 = vmatpush1.bf16.xpose.msra.mxu0 0
        %1066 = vmatprep.subr.bf16.mxu0 0
        %1067 = vmatpush1.bf16.xpose.msra.mxu0 0
        %1068 = vmatprep.subr.bf16.mxu0 0
        %1069 = vmatpush1.bf16.xpose.msra.mxu0 0
        %1070 = vmatprep.subr.bf16.mxu0 0
        %1071 = vmatpush1.bf16.xpose.msra.mxu0 0
        %1072 = vmatprep.subr.bf16.mxu0 0
        %1073 = vmatpush1.bf16.xpose.msra.mxu0 0
        %1074 = vmatprep.subr.bf16.mxu0 0
        %1075 = vmatpush1.bf16.xpose.msra.mxu0 0
        %1076 = vmatprep.mubr.bf16.mxu0 0
        %1077 = vmatmul.mubr.bf16.gmra.mrb[0].mxu0 %v671
        %v1078 = vpop.f32.mrb[0].mxu0
        %v1079 = vadd.f32 0.0, %v1078
        %v1080 = vpop.f32.mrb[0].mxu0
        %v1081 = vpop.f32.mrb[0].mxu0
        %v1082 = vpop.f32.mrb[0].mxu0
        %1083 = vdwg.mxu0
        %v1084 = vunpack.c.l.b16 %v510
        %v1085 = vpack.c.b16 %v1084, %v1084
        %1086 = vrot.lane.b32.xlu0 %v1085, 96
        %v1087 = vpop.permute.xlu0 %1086
        %v1089 = vsel %vm531, %v1087, 0
        %1091 = vmatprep.subr.bf16.mxu0 0
        %1092 = vmatpush1.bf16.xpose.msra.mxu0 %v1089
        %1093 = vmatprep.subr.bf16.mxu0 0
        %1094 = vmatpush1.bf16.xpose.msra.mxu0 0
        %1095 = vmatprep.subr.bf16.mxu0 0
        %1096 = vmatpush1.bf16.xpose.msra.mxu0 0
        %1097 = vmatprep.subr.bf16.mxu0 0
        %1098 = vmatpush1.bf16.xpose.msra.mxu0 0
        %1099 = vmatprep.subr.bf16.mxu0 0
        %1100 = vmatpush1.bf16.xpose.msra.mxu0 0
        %1101 = vmatprep.subr.bf16.mxu0 0
        %1102 = vmatpush1.bf16.xpose.msra.mxu0 0
        %1103 = vmatprep.subr.bf16.mxu0 0
        %1104 = vmatpush1.bf16.xpose.msra.mxu0 0
        %1105 = vmatprep.subr.bf16.mxu0 0
        %1106 = vmatpush1.bf16.xpose.msra.mxu0 0
        %1107 = vmatprep.subr.bf16.mxu0 0
        %1108 = vmatpush1.bf16.xpose.msra.mxu0 0
        %1109 = vmatprep.subr.bf16.mxu0 0
        %1110 = vmatpush1.bf16.xpose.msra.mxu0 0
        %1111 = vmatprep.subr.bf16.mxu0 0
        %1112 = vmatpush1.bf16.xpose.msra.mxu0 0
        %1113 = vmatprep.subr.bf16.mxu0 0
        %1114 = vmatpush1.bf16.xpose.msra.mxu0 0
        %1115 = vmatprep.subr.bf16.mxu0 0
        %1116 = vmatpush1.bf16.xpose.msra.mxu0 0
        %1117 = vmatprep.subr.bf16.mxu0 0
        %1118 = vmatpush1.bf16.xpose.msra.mxu0 0
        %1119 = vmatprep.subr.bf16.mxu0 0
        %1120 = vmatpush1.bf16.xpose.msra.mxu0 0
        %1121 = vmatprep.subr.bf16.mxu0 0
        %1122 = vmatpush1.bf16.xpose.msra.mxu0 0
        %1123 = vmatprep.mubr.bf16.mxu0 0
        %1124 = vmatmul.mubr.bf16.gmra.mrb[0].mxu0 %v717
        %v1125 = vpop.f32.mrb[0].mxu0
        %v1126 = vadd.f32 0.0, %v1125
        %v1127 = vpop.f32.mrb[0].mxu0
        %v1128 = vpop.f32.mrb[0].mxu0
        %v1129 = vpop.f32.mrb[0].mxu0
        %1130 = vdwg.mxu0
        %v1131 = vunpack.c.l.b16 %v512
        %v1132 = vpack.c.b16 %v1131, %v1131
        %1133 = vrot.lane.b32.xlu0 %v1132, 96
        %v1134 = vpop.permute.xlu0 %1133
        %v1136 = vsel %vm531, %v1134, 0
        %1138 = vmatprep.subr.bf16.mxu0 0
        %1139 = vmatpush1.bf16.xpose.msra.mxu0 %v1136
        %1140 = vmatprep.subr.bf16.mxu0 0
        %1141 = vmatpush1.bf16.xpose.msra.mxu0 0
        %1142 = vmatprep.subr.bf16.mxu0 0
        %1143 = vmatpush1.bf16.xpose.msra.mxu0 0
        %1144 = vmatprep.subr.bf16.mxu0 0
        %1145 = vmatpush1.bf16.xpose.msra.mxu0 0
        %1146 = vmatprep.subr.bf16.mxu0 0
        %1147 = vmatpush1.bf16.xpose.msra.mxu0 0
        %1148 = vmatprep.subr.bf16.mxu0 0
        %1149 = vmatpush1.bf16.xpose.msra.mxu0 0
        %1150 = vmatprep.subr.bf16.mxu0 0
        %1151 = vmatpush1.bf16.xpose.msra.mxu0 0
        %1152 = vmatprep.subr.bf16.mxu0 0
        %1153 = vmatpush1.bf16.xpose.msra.mxu0 0
        %1154 = vmatprep.subr.bf16.mxu0 0
        %1155 = vmatpush1.bf16.xpose.msra.mxu0 0
        %1156 = vmatprep.subr.bf16.mxu0 0
        %1157 = vmatpush1.bf16.xpose.msra.mxu0 0
        %1158 = vmatprep.subr.bf16.mxu0 0
        %1159 = vmatpush1.bf16.xpose.msra.mxu0 0
        %1160 = vmatprep.subr.bf16.mxu0 0
        %1161 = vmatpush1.bf16.xpose.msra.mxu0 0
        %1162 = vmatprep.subr.bf16.mxu0 0
        %1163 = vmatpush1.bf16.xpose.msra.mxu0 0
        %1164 = vmatprep.subr.bf16.mxu0 0
        %1165 = vmatpush1.bf16.xpose.msra.mxu0 0
        %1166 = vmatprep.subr.bf16.mxu0 0
        %1167 = vmatpush1.bf16.xpose.msra.mxu0 0
        %1168 = vmatprep.subr.bf16.mxu0 0
        %1169 = vmatpush1.bf16.xpose.msra.mxu0 0
        %1170 = vmatprep.mubr.bf16.mxu0 0
        %1171 = vmatmul.mubr.bf16.gmra.mrb[0].mxu0 %v763
        %v1172 = vpop.f32.mrb[0].mxu0
        %v1173 = vadd.f32 0.0, %v1172
        %v1174 = vpop.f32.mrb[0].mxu0
        %v1175 = vpop.f32.mrb[0].mxu0
        %v1176 = vpop.f32.mrb[0].mxu0
        %1177 = vdwg.mxu0
        %v1178 = vunpack.c.l.b16 %v514
        %v1179 = vpack.c.b16 %v1178, %v1178
        %1180 = vrot.lane.b32.xlu0 %v1179, 96
        %v1181 = vpop.permute.xlu0 %1180
        %v1183 = vsel %vm531, %v1181, 0
        %1185 = vmatprep.subr.bf16.mxu0 0
        %1186 = vmatpush1.bf16.xpose.msra.mxu0 %v1183
        %1187 = vmatprep.subr.bf16.mxu0 0
        %1188 = vmatpush1.bf16.xpose.msra.mxu0 0
        %1189 = vmatprep.subr.bf16.mxu0 0
        %1190 = vmatpush1.bf16.xpose.msra.mxu0 0
        %1191 = vmatprep.subr.bf16.mxu0 0
        %1192 = vmatpush1.bf16.xpose.msra.mxu0 0
        %1193 = vmatprep.subr.bf16.mxu0 0
        %1194 = vmatpush1.bf16.xpose.msra.mxu0 0
        %1195 = vmatprep.subr.bf16.mxu0 0
        %1196 = vmatpush1.bf16.xpose.msra.mxu0 0
        %1197 = vmatprep.subr.bf16.mxu0 0
        %1198 = vmatpush1.bf16.xpose.msra.mxu0 0
        %1199 = vmatprep.subr.bf16.mxu0 0
        %1200 = vmatpush1.bf16.xpose.msra.mxu0 0
        %1201 = vmatprep.subr.bf16.mxu0 0
        %1202 = vmatpush1.bf16.xpose.msra.mxu0 0
        %1203 = vmatprep.subr.bf16.mxu0 0
        %1204 = vmatpush1.bf16.xpose.msra.mxu0 0
        %1205 = vmatprep.subr.bf16.mxu0 0
        %1206 = vmatpush1.bf16.xpose.msra.mxu0 0
        %1207 = vmatprep.subr.bf16.mxu0 0
        %1208 = vmatpush1.bf16.xpose.msra.mxu0 0
        %1209 = vmatprep.subr.bf16.mxu0 0
        %1210 = vmatpush1.bf16.xpose.msra.mxu0 0
        %1211 = vmatprep.subr.bf16.mxu0 0
        %1212 = vmatpush1.bf16.xpose.msra.mxu0 0
        %1213 = vmatprep.subr.bf16.mxu0 0
        %1214 = vmatpush1.bf16.xpose.msra.mxu0 0
        %1215 = vmatprep.subr.bf16.mxu0 0
        %1216 = vmatpush1.bf16.xpose.msra.mxu0 0
        %1217 = vmatprep.mubr.bf16.mxu0 0
        %1218 = vmatmul.mubr.bf16.gmra.mrb[0].mxu0 %v809
        %v1219 = vpop.f32.mrb[0].mxu0
        %v1220 = vadd.f32 0.0, %v1219
        %v1221 = vpop.f32.mrb[0].mxu0
        %v1222 = vpop.f32.mrb[0].mxu0
        %v1223 = vpop.f32.mrb[0].mxu0
        %1224 = vdwg.mxu0
        %v1225 = vunpack.c.l.b16 %v516
        %v1226 = vpack.c.b16 %v1225, %v1225
        %1227 = vrot.lane.b32.xlu0 %v1226, 96
        %v1228 = vpop.permute.xlu0 %1227
        %v1230 = vsel %vm531, %v1228, 0
        %1232 = vmatprep.subr.bf16.mxu0 0
        %1233 = vmatpush1.bf16.xpose.msra.mxu0 %v1230
        %1234 = vmatprep.subr.bf16.mxu0 0
        %1235 = vmatpush1.bf16.xpose.msra.mxu0 0
        %1236 = vmatprep.subr.bf16.mxu0 0
        %1237 = vmatpush1.bf16.xpose.msra.mxu0 0
        %1238 = vmatprep.subr.bf16.mxu0 0
        %1239 = vmatpush1.bf16.xpose.msra.mxu0 0
        %1240 = vmatprep.subr.bf16.mxu0 0
        %1241 = vmatpush1.bf16.xpose.msra.mxu0 0
        %1242 = vmatprep.subr.bf16.mxu0 0
        %1243 = vmatpush1.bf16.xpose.msra.mxu0 0
        %1244 = vmatprep.subr.bf16.mxu0 0
        %1245 = vmatpush1.bf16.xpose.msra.mxu0 0
        %1246 = vmatprep.subr.bf16.mxu0 0
        %1247 = vmatpush1.bf16.xpose.msra.mxu0 0
        %1248 = vmatprep.subr.bf16.mxu0 0
        %1249 = vmatpush1.bf16.xpose.msra.mxu0 0
        %1250 = vmatprep.subr.bf16.mxu0 0
        %1251 = vmatpush1.bf16.xpose.msra.mxu0 0
        %1252 = vmatprep.subr.bf16.mxu0 0
        %1253 = vmatpush1.bf16.xpose.msra.mxu0 0
        %1254 = vmatprep.subr.bf16.mxu0 0
        %1255 = vmatpush1.bf16.xpose.msra.mxu0 0
        %1256 = vmatprep.subr.bf16.mxu0 0
        %1257 = vmatpush1.bf16.xpose.msra.mxu0 0
        %1258 = vmatprep.subr.bf16.mxu0 0
        %1259 = vmatpush1.bf16.xpose.msra.mxu0 0
        %1260 = vmatprep.subr.bf16.mxu0 0
        %1261 = vmatpush1.bf16.xpose.msra.mxu0 0
        %1262 = vmatprep.subr.bf16.mxu0 0
        %1263 = vmatpush1.bf16.xpose.msra.mxu0 0
        %1264 = vmatprep.mubr.bf16.mxu0 0
        %1265 = vmatmul.mubr.bf16.gmra.mrb[0].mxu0 %v855
        %v1266 = vpop.f32.mrb[0].mxu0
        %v1267 = vadd.f32 0.0, %v1266
        %v1268 = vpop.f32.mrb[0].mxu0
        %v1269 = vpop.f32.mrb[0].mxu0
        %v1270 = vpop.f32.mrb[0].mxu0
        %1271 = vdwg.mxu0
        %vm1272 = vcmask 130048
        %v1273 = vsel %vm1272, %v573, -inf
        %1274 = vmax.xlane.f32.xlu0 %v1273
        %v1275 = vpop.xlane.xlu0 %1274
        %v1276 = vsel %vm1272, %v619, -inf
        %1277 = vmax.xlane.f32.xlu0 %v1276
        %v1278 = vpop.xlane.xlu0 %1277
        %v1279 = vsel %vm1272, %v665, -inf
        %1280 = vmax.xlane.f32.xlu0 %v1279
        %v1281 = vpop.xlane.xlu0 %1280
        %v1282 = vsel %vm1272, %v711, -inf
        %1283 = vmax.xlane.f32.xlu0 %v1282
        %v1284 = vpop.xlane.xlu0 %1283
        %v1285 = vsel %vm1272, %v757, -inf
        %1286 = vmax.xlane.f32.xlu0 %v1285
        %v1287 = vpop.xlane.xlu0 %1286
        %v1288 = vsel %vm1272, %v803, -inf
        %1289 = vmax.xlane.f32.xlu0 %v1288
        %v1290 = vpop.xlane.xlu0 %1289
        %v1291 = vsel %vm1272, %v849, -inf
        %1292 = vmax.xlane.f32.xlu0 %v1291
        %v1293 = vpop.xlane.xlu0 %1292
        %v1294 = vsel %vm1272, %v895, -inf
        %1295 = vmax.xlane.f32.xlu0 %v1294
        %v1296 = vpop.xlane.xlu0 %1295
        %v1297 = vsel %vm531, %v940, -inf
        %1298 = vmax.xlane.f32.xlu0 %v1297
        %v1299 = vpop.xlane.xlu0 %1298
        %v1300 = vsel %vm531, %v985, -inf
        %1301 = vmax.xlane.f32.xlu0 %v1300
        %v1302 = vpop.xlane.xlu0 %1301
        %v1303 = vsel %vm531, %v1032, -inf
        %1304 = vmax.xlane.f32.xlu0 %v1303
        %v1305 = vpop.xlane.xlu0 %1304
        %v1306 = vsel %vm531, %v1079, -inf
        %1307 = vmax.xlane.f32.xlu0 %v1306
        %v1308 = vpop.xlane.xlu0 %1307
        %v1309 = vsel %vm531, %v1126, -inf
        %1310 = vmax.xlane.f32.xlu0 %v1309
        %v1311 = vpop.xlane.xlu0 %1310
        %v1312 = vsel %vm531, %v1173, -inf
        %1313 = vmax.xlane.f32.xlu0 %v1312
        %v1314 = vpop.xlane.xlu0 %1313
        %v1315 = vsel %vm531, %v1220, -inf
        %1316 = vmax.xlane.f32.xlu0 %v1315
        %v1317 = vpop.xlane.xlu0 %1316
        %v1318 = vsel %vm531, %v1267, -inf
        %1319 = vmax.xlane.f32.xlu0 %v1318
        %v1320 = vpop.xlane.xlu0 %1319
        %v1321 = vmax.f32 %v1275, %v1299
        %v1322 = vmax.f32 %v1278, %v1302
        %v1323 = vmax.f32 %v1281, %v1305
        %v1324 = vmax.f32 %v1284, %v1308
        %v1325 = vmax.f32 %v1287, %v1311
        %v1326 = vmax.f32 %v1290, %v1314
        %v1327 = vmax.f32 %v1293, %v1317
        %v1328 = vmax.f32 %v1296, %v1320
        %v1329 = vsub.f32 %v573, %v1321
        %v1330 = vsub.f32 %v619, %v1322
        %v1331 = vsub.f32 %v665, %v1323
        %v1332 = vsub.f32 %v711, %v1324
        %v1333 = vsub.f32 %v757, %v1325
        %v1334 = vsub.f32 %v803, %v1326
        %v1335 = vsub.f32 %v849, %v1327
        %v1336 = vsub.f32 %v895, %v1328
        %v1337 = vmul.f32 %v1329, 1.442695
        %v1338 = vpow.pop %v1337
        %v1339 = vmul.f32 %v1330, 1.442695
        %v1340 = vpow.pop %v1339
        %v1341 = vmul.f32 %v1331, 1.442695
        %v1342 = vpow.pop %v1341
        %v1343 = vmul.f32 %v1332, 1.442695
        %v1344 = vpow.pop %v1343
        %v1345 = vmul.f32 %v1333, 1.442695
        %v1346 = vpow.pop %v1345
        %v1347 = vmul.f32 %v1334, 1.442695
        %v1348 = vpow.pop %v1347
        %v1349 = vmul.f32 %v1335, 1.442695
        %v1350 = vpow.pop %v1349
        %v1351 = vmul.f32 %v1336, 1.442695
        %v1352 = vpow.pop %v1351
        %v1353 = vsub.f32 %v940, %v1321
        %v1354 = vsub.f32 %v985, %v1322
        %v1355 = vsub.f32 %v1032, %v1323
        %v1356 = vsub.f32 %v1079, %v1324
        %v1357 = vsub.f32 %v1126, %v1325
        %v1358 = vsub.f32 %v1173, %v1326
        %v1359 = vsub.f32 %v1220, %v1327
        %v1360 = vsub.f32 %v1267, %v1328
        %v1361 = vmul.f32 %v1353, 1.442695
        %v1362 = vpow.pop %v1361
        %v1363 = vmul.f32 %v1354, 1.442695
        %v1364 = vpow.pop %v1363
        %v1365 = vmul.f32 %v1355, 1.442695
        %v1366 = vpow.pop %v1365
        %v1367 = vmul.f32 %v1356, 1.442695
        %v1368 = vpow.pop %v1367
        %v1369 = vmul.f32 %v1357, 1.442695
        %v1370 = vpow.pop %v1369
        %v1371 = vmul.f32 %v1358, 1.442695
        %v1372 = vpow.pop %v1371
        %v1373 = vmul.f32 %v1359, 1.442695
        %v1374 = vpow.pop %v1373
        %v1375 = vmul.f32 %v1360, 1.442695
        %v1376 = vpow.pop %v1375
        %v1377 = vsel %vm1272, %v1338, 0.0
        %1378 = vadd.xlane.f32.xlu0 %v1377
        %v1379 = vpop.xlane.xlu0 %1378
        %v1380 = vsel %vm1272, %v1340, 0.0
        %1381 = vadd.xlane.f32.xlu0 %v1380
        %v1382 = vpop.xlane.xlu0 %1381
        %v1383 = vsel %vm1272, %v1342, 0.0
        %1384 = vadd.xlane.f32.xlu0 %v1383
        %v1385 = vpop.xlane.xlu0 %1384
        %v1386 = vsel %vm1272, %v1344, 0.0
        %1387 = vadd.xlane.f32.xlu0 %v1386
        %v1388 = vpop.xlane.xlu0 %1387
        %v1389 = vsel %vm1272, %v1346, 0.0
        %1390 = vadd.xlane.f32.xlu0 %v1389
        %v1391 = vpop.xlane.xlu0 %1390
        %v1392 = vsel %vm1272, %v1348, 0.0
        %1393 = vadd.xlane.f32.xlu0 %v1392
        %v1394 = vpop.xlane.xlu0 %1393
        %v1395 = vsel %vm1272, %v1350, 0.0
        %1396 = vadd.xlane.f32.xlu0 %v1395
        %v1397 = vpop.xlane.xlu0 %1396
        %v1398 = vsel %vm1272, %v1352, 0.0
        %1399 = vadd.xlane.f32.xlu0 %v1398
        %v1400 = vpop.xlane.xlu0 %1399
        %v1401 = vsel %vm531, %v1362, 0.0
        %1402 = vadd.xlane.f32.xlu0 %v1401
        %v1403 = vpop.xlane.xlu0 %1402
        %v1404 = vsel %vm531, %v1364, 0.0
        %1405 = vadd.xlane.f32.xlu0 %v1404
        %v1406 = vpop.xlane.xlu0 %1405
        %v1407 = vsel %vm531, %v1366, 0.0
        %1408 = vadd.xlane.f32.xlu0 %v1407
        %v1409 = vpop.xlane.xlu0 %1408
        %v1410 = vsel %vm531, %v1368, 0.0
        %1411 = vadd.xlane.f32.xlu0 %v1410
        %v1412 = vpop.xlane.xlu0 %1411
        %v1413 = vsel %vm531, %v1370, 0.0
        %1414 = vadd.xlane.f32.xlu0 %v1413
        %v1415 = vpop.xlane.xlu0 %1414
        %v1416 = vsel %vm531, %v1372, 0.0
        %1417 = vadd.xlane.f32.xlu0 %v1416
        %v1418 = vpop.xlane.xlu0 %1417
        %v1419 = vsel %vm531, %v1374, 0.0
        %1420 = vadd.xlane.f32.xlu0 %v1419
        %v1421 = vpop.xlane.xlu0 %1420
        %v1422 = vsel %vm531, %v1376, 0.0
        %1423 = vadd.xlane.f32.xlu0 %v1422
        %v1424 = vpop.xlane.xlu0 %1423
        %v1425 = vadd.f32 %v1379, %v1403
        %v1426 = vadd.f32 %v1382, %v1406
        %v1427 = vadd.f32 %v1385, %v1409
        %v1428 = vadd.f32 %v1388, %v1412
        %v1429 = vadd.f32 %v1391, %v1415
        %v1430 = vadd.f32 %v1394, %v1418
        %v1431 = vadd.f32 %v1397, %v1421
        %v1432 = vadd.f32 %v1400, %v1424
        %v1433 = vrcp.pop %v1425
        %v1434 = vmul.f32 1.0, %v1433
        %v1435 = vrcp.pop %v1426
        %v1436 = vmul.f32 1.0, %v1435
        %v1437 = vrcp.pop %v1427
        %v1438 = vmul.f32 1.0, %v1437
        %v1439 = vrcp.pop %v1428
        %v1440 = vmul.f32 1.0, %v1439
        %v1441 = vrcp.pop %v1429
        %v1442 = vmul.f32 1.0, %v1441
        %v1443 = vrcp.pop %v1430
        %v1444 = vmul.f32 1.0, %v1443
        %v1445 = vrcp.pop %v1431
        %v1446 = vmul.f32 1.0, %v1445
        %v1447 = vrcp.pop %v1432
        %v1448 = vmul.f32 1.0, %v1447
        %v1449 = vpack.c.bf16 %v1338, %v1338
        %v1450 = vpack.c.bf16 %v1340, %v1340
        %v1451 = vpack.c.bf16 %v1342, %v1342
        %v1452 = vpack.c.bf16 %v1344, %v1344
        %v1453 = vpack.c.bf16 %v1346, %v1346
        %v1454 = vpack.c.bf16 %v1348, %v1348
        %v1455 = vpack.c.bf16 %v1350, %v1350
        %v1456 = vpack.c.bf16 %v1352, %v1352
        %v1457 = vpack.c.bf16 %v1362, %v1362
        %v1458 = vpack.c.bf16 %v1364, %v1364
        %v1459 = vpack.c.bf16 %v1366, %v1366
        %v1460 = vpack.c.bf16 %v1368, %v1368
        %v1461 = vpack.c.bf16 %v1370, %v1370
        %v1462 = vpack.c.bf16 %v1372, %v1372
        %v1463 = vpack.c.bf16 %v1374, %v1374
        %v1464 = vpack.c.bf16 %v1376, %v1376
        %1465 = vrot.lane.b32.xlu0 %v503, 64
        %v1466 = vpop.permute.xlu0 %1465
        %v1468 = vsel %vm531, %v1457, 0
        %vm1470 = vcmask 1043456
        %v1472 = vsel %vm1470, %v1466, 0
        %1474 = vmatprep.subr.bf16.mxu0 0
        %1475 = vmatpush1.bf16.msra.mxu0 %v1472
        %1476 = vmatprep.subr.bf16.mxu0 0
        %1477 = vmatpush1.bf16.msra.mxu0 0
        %1478 = vmatprep.subr.bf16.mxu0 0
        %1479 = vmatpush1.bf16.msra.mxu0 0
        %1480 = vmatprep.subr.bf16.mxu0 0
        %1481 = vmatpush1.bf16.msra.mxu0 0
        %1482 = vmatprep.subr.bf16.mxu0 0
        %1483 = vmatpush1.bf16.msra.mxu0 0
        %1484 = vmatprep.subr.bf16.mxu0 0
        %1485 = vmatpush1.bf16.msra.mxu0 0
        %1486 = vmatprep.subr.bf16.mxu0 0
        %1487 = vmatpush1.bf16.msra.mxu0 0
        %1488 = vmatprep.subr.bf16.mxu0 0
        %1489 = vmatpush1.bf16.msra.mxu0 0
        %1490 = vmatprep.subr.bf16.mxu0 0
        %1491 = vmatpush1.bf16.msra.mxu0 0
        %1492 = vmatprep.subr.bf16.mxu0 0
        %1493 = vmatpush1.bf16.msra.mxu0 0
        %1494 = vmatprep.subr.bf16.mxu0 0
        %1495 = vmatpush1.bf16.msra.mxu0 0
        %1496 = vmatprep.subr.bf16.mxu0 0
        %1497 = vmatpush1.bf16.msra.mxu0 0
        %1498 = vmatprep.subr.bf16.mxu0 0
        %1499 = vmatpush1.bf16.msra.mxu0 0
        %1500 = vmatprep.subr.bf16.mxu0 0
        %1501 = vmatpush1.bf16.msra.mxu0 0
        %1502 = vmatprep.subr.bf16.mxu0 0
        %1503 = vmatpush1.bf16.msra.mxu0 0
        %1504 = vmatprep.subr.bf16.mxu0 0
        %1505 = vmatpush1.bf16.msra.mxu0 0
        %1506 = vmatprep.mubr.bf16.mxu0 0
        %1507 = vmatmul.mubr.bf16.gmra.mrb[0].mxu0 %v1468
        %v1508 = vpop.f32.mrb[0].mxu0
        %v1509 = vadd.f32 0.0, %v1508
        %v1510 = vpop.f32.mrb[0].mxu0
        %v1511 = vpop.f32.mrb[0].mxu0
        %v1512 = vpop.f32.mrb[0].mxu0
        %1513 = vdwg.mxu0
        %1514 = vrot.lane.b32.xlu0 %v504, 64
        %v1515 = vpop.permute.xlu0 %1514
        %v1517 = vsel %vm531, %v1458, 0
        %v1520 = vsel %vm1470, %v1515, 0
        %1522 = vmatprep.subr.bf16.mxu0 0
        %1523 = vmatpush1.bf16.msra.mxu0 %v1520
        %1524 = vmatprep.subr.bf16.mxu0 0
        %1525 = vmatpush1.bf16.msra.mxu0 0
        %1526 = vmatprep.subr.bf16.mxu0 0
        %1527 = vmatpush1.bf16.msra.mxu0 0
        %1528 = vmatprep.subr.bf16.mxu0 0
        %1529 = vmatpush1.bf16.msra.mxu0 0
        %1530 = vmatprep.subr.bf16.mxu0 0
        %1531 = vmatpush1.bf16.msra.mxu0 0
        %1532 = vmatprep.subr.bf16.mxu0 0
        %1533 = vmatpush1.bf16.msra.mxu0 0
        %1534 = vmatprep.subr.bf16.mxu0 0
        %1535 = vmatpush1.bf16.msra.mxu0 0
        %1536 = vmatprep.subr.bf16.mxu0 0
        %1537 = vmatpush1.bf16.msra.mxu0 0
        %1538 = vmatprep.subr.bf16.mxu0 0
        %1539 = vmatpush1.bf16.msra.mxu0 0
        %1540 = vmatprep.subr.bf16.mxu0 0
        %1541 = vmatpush1.bf16.msra.mxu0 0
        %1542 = vmatprep.subr.bf16.mxu0 0
        %1543 = vmatpush1.bf16.msra.mxu0 0
        %1544 = vmatprep.subr.bf16.mxu0 0
        %1545 = vmatpush1.bf16.msra.mxu0 0
        %1546 = vmatprep.subr.bf16.mxu0 0
        %1547 = vmatpush1.bf16.msra.mxu0 0
        %1548 = vmatprep.subr.bf16.mxu0 0
        %1549 = vmatpush1.bf16.msra.mxu0 0
        %1550 = vmatprep.subr.bf16.mxu0 0
        %1551 = vmatpush1.bf16.msra.mxu0 0
        %1552 = vmatprep.subr.bf16.mxu0 0
        %1553 = vmatpush1.bf16.msra.mxu0 0
        %1554 = vmatprep.mubr.bf16.mxu0 0
        %1555 = vmatmul.mubr.bf16.gmra.mrb[0].mxu0 %v1517
        %v1556 = vpop.f32.mrb[0].mxu0
        %v1557 = vadd.f32 0.0, %v1556
        %v1558 = vpop.f32.mrb[0].mxu0
        %v1559 = vpop.f32.mrb[0].mxu0
        %v1560 = vpop.f32.mrb[0].mxu0
        %1561 = vdwg.mxu0
        %1562 = vrot.lane.b32.xlu0 %v991, 64
        %v1563 = vpop.permute.xlu0 %1562
        %v1565 = vsel %vm531, %v1459, 0
        %v1568 = vsel %vm1470, %v1563, 0
        %1570 = vmatprep.subr.bf16.mxu0 0
        %1571 = vmatpush1.bf16.msra.mxu0 %v1568
        %1572 = vmatprep.subr.bf16.mxu0 0
        %1573 = vmatpush1.bf16.msra.mxu0 0
        %1574 = vmatprep.subr.bf16.mxu0 0
        %1575 = vmatpush1.bf16.msra.mxu0 0
        %1576 = vmatprep.subr.bf16.mxu0 0
        %1577 = vmatpush1.bf16.msra.mxu0 0
        %1578 = vmatprep.subr.bf16.mxu0 0
        %1579 = vmatpush1.bf16.msra.mxu0 0
        %1580 = vmatprep.subr.bf16.mxu0 0
        %1581 = vmatpush1.bf16.msra.mxu0 0
        %1582 = vmatprep.subr.bf16.mxu0 0
        %1583 = vmatpush1.bf16.msra.mxu0 0
        %1584 = vmatprep.subr.bf16.mxu0 0
        %1585 = vmatpush1.bf16.msra.mxu0 0
        %1586 = vmatprep.subr.bf16.mxu0 0
        %1587 = vmatpush1.bf16.msra.mxu0 0
        %1588 = vmatprep.subr.bf16.mxu0 0
        %1589 = vmatpush1.bf16.msra.mxu0 0
        %1590 = vmatprep.subr.bf16.mxu0 0
        %1591 = vmatpush1.bf16.msra.mxu0 0
        %1592 = vmatprep.subr.bf16.mxu0 0
        %1593 = vmatpush1.bf16.msra.mxu0 0
        %1594 = vmatprep.subr.bf16.mxu0 0
        %1595 = vmatpush1.bf16.msra.mxu0 0
        %1596 = vmatprep.subr.bf16.mxu0 0
        %1597 = vmatpush1.bf16.msra.mxu0 0
        %1598 = vmatprep.subr.bf16.mxu0 0
        %1599 = vmatpush1.bf16.msra.mxu0 0
        %1600 = vmatprep.subr.bf16.mxu0 0
        %1601 = vmatpush1.bf16.msra.mxu0 0
        %1602 = vmatprep.mubr.bf16.mxu0 0
        %1603 = vmatmul.mubr.bf16.gmra.mrb[0].mxu0 %v1565
        %v1604 = vpop.f32.mrb[0].mxu0
        %v1605 = vadd.f32 0.0, %v1604
        %v1606 = vpop.f32.mrb[0].mxu0
        %v1607 = vpop.f32.mrb[0].mxu0
        %v1608 = vpop.f32.mrb[0].mxu0
        %1609 = vdwg.mxu0
        %1610 = vrot.lane.b32.xlu0 %v1038, 64
        %v1611 = vpop.permute.xlu0 %1610
        %v1613 = vsel %vm531, %v1460, 0
        %v1616 = vsel %vm1470, %v1611, 0
        %1618 = vmatprep.subr.bf16.mxu0 0
        %1619 = vmatpush1.bf16.msra.mxu0 %v1616
        %1620 = vmatprep.subr.bf16.mxu0 0
        %1621 = vmatpush1.bf16.msra.mxu0 0
        %1622 = vmatprep.subr.bf16.mxu0 0
        %1623 = vmatpush1.bf16.msra.mxu0 0
        %1624 = vmatprep.subr.bf16.mxu0 0
        %1625 = vmatpush1.bf16.msra.mxu0 0
        %1626 = vmatprep.subr.bf16.mxu0 0
        %1627 = vmatpush1.bf16.msra.mxu0 0
        %1628 = vmatprep.subr.bf16.mxu0 0
        %1629 = vmatpush1.bf16.msra.mxu0 0
        %1630 = vmatprep.subr.bf16.mxu0 0
        %1631 = vmatpush1.bf16.msra.mxu0 0
        %1632 = vmatprep.subr.bf16.mxu0 0
        %1633 = vmatpush1.bf16.msra.mxu0 0
        %1634 = vmatprep.subr.bf16.mxu0 0
        %1635 = vmatpush1.bf16.msra.mxu0 0
        %1636 = vmatprep.subr.bf16.mxu0 0
        %1637 = vmatpush1.bf16.msra.mxu0 0
        %1638 = vmatprep.subr.bf16.mxu0 0
        %1639 = vmatpush1.bf16.msra.mxu0 0
        %1640 = vmatprep.subr.bf16.mxu0 0
        %1641 = vmatpush1.bf16.msra.mxu0 0
        %1642 = vmatprep.subr.bf16.mxu0 0
        %1643 = vmatpush1.bf16.msra.mxu0 0
        %1644 = vmatprep.subr.bf16.mxu0 0
        %1645 = vmatpush1.bf16.msra.mxu0 0
        %1646 = vmatprep.subr.bf16.mxu0 0
        %1647 = vmatpush1.bf16.msra.mxu0 0
        %1648 = vmatprep.subr.bf16.mxu0 0
        %1649 = vmatpush1.bf16.msra.mxu0 0
        %1650 = vmatprep.mubr.bf16.mxu0 0
        %1651 = vmatmul.mubr.bf16.gmra.mrb[0].mxu0 %v1613
        %v1652 = vpop.f32.mrb[0].mxu0
        %v1653 = vadd.f32 0.0, %v1652
        %v1654 = vpop.f32.mrb[0].mxu0
        %v1655 = vpop.f32.mrb[0].mxu0
        %v1656 = vpop.f32.mrb[0].mxu0
        %1657 = vdwg.mxu0
        %1658 = vrot.lane.b32.xlu0 %v1085, 64
        %v1659 = vpop.permute.xlu0 %1658
        %v1661 = vsel %vm531, %v1461, 0
        %v1664 = vsel %vm1470, %v1659, 0
        %1666 = vmatprep.subr.bf16.mxu0 0
        %1667 = vmatpush1.bf16.msra.mxu0 %v1664
        %1668 = vmatprep.subr.bf16.mxu0 0
        %1669 = vmatpush1.bf16.msra.mxu0 0
        %1670 = vmatprep.subr.bf16.mxu0 0
        %1671 = vmatpush1.bf16.msra.mxu0 0
        %1672 = vmatprep.subr.bf16.mxu0 0
        %1673 = vmatpush1.bf16.msra.mxu0 0
        %1674 = vmatprep.subr.bf16.mxu0 0
        %1675 = vmatpush1.bf16.msra.mxu0 0
        %1676 = vmatprep.subr.bf16.mxu0 0
        %1677 = vmatpush1.bf16.msra.mxu0 0
        %1678 = vmatprep.subr.bf16.mxu0 0
        %1679 = vmatpush1.bf16.msra.mxu0 0
        %1680 = vmatprep.subr.bf16.mxu0 0
        %1681 = vmatpush1.bf16.msra.mxu0 0
        %1682 = vmatprep.subr.bf16.mxu0 0
        %1683 = vmatpush1.bf16.msra.mxu0 0
        %1684 = vmatprep.subr.bf16.mxu0 0
        %1685 = vmatpush1.bf16.msra.mxu0 0
        %1686 = vmatprep.subr.bf16.mxu0 0
        %1687 = vmatpush1.bf16.msra.mxu0 0
        %1688 = vmatprep.subr.bf16.mxu0 0
        %1689 = vmatpush1.bf16.msra.mxu0 0
        %1690 = vmatprep.subr.bf16.mxu0 0
        %1691 = vmatpush1.bf16.msra.mxu0 0
        %1692 = vmatprep.subr.bf16.mxu0 0
        %1693 = vmatpush1.bf16.msra.mxu0 0
        %1694 = vmatprep.subr.bf16.mxu0 0
        %1695 = vmatpush1.bf16.msra.mxu0 0
        %1696 = vmatprep.subr.bf16.mxu0 0
        %1697 = vmatpush1.bf16.msra.mxu0 0
        %1698 = vmatprep.mubr.bf16.mxu0 0
        %1699 = vmatmul.mubr.bf16.gmra.mrb[0].mxu0 %v1661
        %v1700 = vpop.f32.mrb[0].mxu0
        %v1701 = vadd.f32 0.0, %v1700
        %v1702 = vpop.f32.mrb[0].mxu0
        %v1703 = vpop.f32.mrb[0].mxu0
        %v1704 = vpop.f32.mrb[0].mxu0
        %1705 = vdwg.mxu0
        %1706 = vrot.lane.b32.xlu0 %v1132, 64
        %v1707 = vpop.permute.xlu0 %1706
        %v1709 = vsel %vm531, %v1462, 0
        %v1712 = vsel %vm1470, %v1707, 0
        %1714 = vmatprep.subr.bf16.mxu0 0
        %1715 = vmatpush1.bf16.msra.mxu0 %v1712
        %1716 = vmatprep.subr.bf16.mxu0 0
        %1717 = vmatpush1.bf16.msra.mxu0 0
        %1718 = vmatprep.subr.bf16.mxu0 0
        %1719 = vmatpush1.bf16.msra.mxu0 0
        %1720 = vmatprep.subr.bf16.mxu0 0
        %1721 = vmatpush1.bf16.msra.mxu0 0
        %1722 = vmatprep.subr.bf16.mxu0 0
        %1723 = vmatpush1.bf16.msra.mxu0 0
        %1724 = vmatprep.subr.bf16.mxu0 0
        %1725 = vmatpush1.bf16.msra.mxu0 0
        %1726 = vmatprep.subr.bf16.mxu0 0
        %1727 = vmatpush1.bf16.msra.mxu0 0
        %1728 = vmatprep.subr.bf16.mxu0 0
        %1729 = vmatpush1.bf16.msra.mxu0 0
        %1730 = vmatprep.subr.bf16.mxu0 0
        %1731 = vmatpush1.bf16.msra.mxu0 0
        %1732 = vmatprep.subr.bf16.mxu0 0
        %1733 = vmatpush1.bf16.msra.mxu0 0
        %1734 = vmatprep.subr.bf16.mxu0 0
        %1735 = vmatpush1.bf16.msra.mxu0 0
        %1736 = vmatprep.subr.bf16.mxu0 0
        %1737 = vmatpush1.bf16.msra.mxu0 0
        %1738 = vmatprep.subr.bf16.mxu0 0
        %1739 = vmatpush1.bf16.msra.mxu0 0
        %1740 = vmatprep.subr.bf16.mxu0 0
        %1741 = vmatpush1.bf16.msra.mxu0 0
        %1742 = vmatprep.subr.bf16.mxu0 0
        %1743 = vmatpush1.bf16.msra.mxu0 0
        %1744 = vmatprep.subr.bf16.mxu0 0
        %1745 = vmatpush1.bf16.msra.mxu0 0
        %1746 = vmatprep.mubr.bf16.mxu0 0
        %1747 = vmatmul.mubr.bf16.gmra.mrb[0].mxu0 %v1709
        %v1748 = vpop.f32.mrb[0].mxu0
        %v1749 = vadd.f32 0.0, %v1748
        %v1750 = vpop.f32.mrb[0].mxu0
        %v1751 = vpop.f32.mrb[0].mxu0
        %v1752 = vpop.f32.mrb[0].mxu0
        %1753 = vdwg.mxu0
        %1754 = vrot.lane.b32.xlu0 %v1179, 64
        %v1755 = vpop.permute.xlu0 %1754
        %v1757 = vsel %vm531, %v1463, 0
        %v1760 = vsel %vm1470, %v1755, 0
        %1762 = vmatprep.subr.bf16.mxu0 0
        %1763 = vmatpush1.bf16.msra.mxu0 %v1760
        %1764 = vmatprep.subr.bf16.mxu0 0
        %1765 = vmatpush1.bf16.msra.mxu0 0
        %1766 = vmatprep.subr.bf16.mxu0 0
        %1767 = vmatpush1.bf16.msra.mxu0 0
        %1768 = vmatprep.subr.bf16.mxu0 0
        %1769 = vmatpush1.bf16.msra.mxu0 0
        %1770 = vmatprep.subr.bf16.mxu0 0
        %1771 = vmatpush1.bf16.msra.mxu0 0
        %1772 = vmatprep.subr.bf16.mxu0 0
        %1773 = vmatpush1.bf16.msra.mxu0 0
        %1774 = vmatprep.subr.bf16.mxu0 0
        %1775 = vmatpush1.bf16.msra.mxu0 0
        %1776 = vmatprep.subr.bf16.mxu0 0
        %1777 = vmatpush1.bf16.msra.mxu0 0
        %1778 = vmatprep.subr.bf16.mxu0 0
        %1779 = vmatpush1.bf16.msra.mxu0 0
        %1780 = vmatprep.subr.bf16.mxu0 0
        %1781 = vmatpush1.bf16.msra.mxu0 0
        %1782 = vmatprep.subr.bf16.mxu0 0
        %1783 = vmatpush1.bf16.msra.mxu0 0
        %1784 = vmatprep.subr.bf16.mxu0 0
        %1785 = vmatpush1.bf16.msra.mxu0 0
        %1786 = vmatprep.subr.bf16.mxu0 0
        %1787 = vmatpush1.bf16.msra.mxu0 0
        %1788 = vmatprep.subr.bf16.mxu0 0
        %1789 = vmatpush1.bf16.msra.mxu0 0
        %1790 = vmatprep.subr.bf16.mxu0 0
        %1791 = vmatpush1.bf16.msra.mxu0 0
        %1792 = vmatprep.subr.bf16.mxu0 0
        %1793 = vmatpush1.bf16.msra.mxu0 0
        %1794 = vmatprep.mubr.bf16.mxu0 0
        %1795 = vmatmul.mubr.bf16.gmra.mrb[0].mxu0 %v1757
        %v1796 = vpop.f32.mrb[0].mxu0
        %v1797 = vadd.f32 0.0, %v1796
        %v1798 = vpop.f32.mrb[0].mxu0
        %v1799 = vpop.f32.mrb[0].mxu0
        %v1800 = vpop.f32.mrb[0].mxu0
        %1801 = vdwg.mxu0
        %1802 = vrot.lane.b32.xlu0 %v1226, 64
        %v1803 = vpop.permute.xlu0 %1802
        %v1805 = vsel %vm531, %v1464, 0
        %v1808 = vsel %vm1470, %v1803, 0
        %1810 = vmatprep.subr.bf16.mxu0 0
        %1811 = vmatpush1.bf16.msra.mxu0 %v1808
        %1812 = vmatprep.subr.bf16.mxu0 0
        %1813 = vmatpush1.bf16.msra.mxu0 0
        %1814 = vmatprep.subr.bf16.mxu0 0
        %1815 = vmatpush1.bf16.msra.mxu0 0
        %1816 = vmatprep.subr.bf16.mxu0 0
        %1817 = vmatpush1.bf16.msra.mxu0 0
        %1818 = vmatprep.subr.bf16.mxu0 0
        %1819 = vmatpush1.bf16.msra.mxu0 0
        %1820 = vmatprep.subr.bf16.mxu0 0
        %1821 = vmatpush1.bf16.msra.mxu0 0
        %1822 = vmatprep.subr.bf16.mxu0 0
        %1823 = vmatpush1.bf16.msra.mxu0 0
        %1824 = vmatprep.subr.bf16.mxu0 0
        %1825 = vmatpush1.bf16.msra.mxu0 0
        %1826 = vmatprep.subr.bf16.mxu0 0
        %1827 = vmatpush1.bf16.msra.mxu0 0
        %1828 = vmatprep.subr.bf16.mxu0 0
        %1829 = vmatpush1.bf16.msra.mxu0 0
        %1830 = vmatprep.subr.bf16.mxu0 0
        %1831 = vmatpush1.bf16.msra.mxu0 0
        %1832 = vmatprep.subr.bf16.mxu0 0
        %1833 = vmatpush1.bf16.msra.mxu0 0
        %1834 = vmatprep.subr.bf16.mxu0 0
        %1835 = vmatpush1.bf16.msra.mxu0 0
        %1836 = vmatprep.subr.bf16.mxu0 0
        %1837 = vmatpush1.bf16.msra.mxu0 0
        %1838 = vmatprep.subr.bf16.mxu0 0
        %1839 = vmatpush1.bf16.msra.mxu0 0
        %1840 = vmatprep.subr.bf16.mxu0 0
        %1841 = vmatpush1.bf16.msra.mxu0 0
        %1842 = vmatprep.mubr.bf16.mxu0 0
        %1843 = vmatmul.mubr.bf16.gmra.mrb[0].mxu0 %v1805
        %v1844 = vpop.f32.mrb[0].mxu0
        %v1845 = vadd.f32 0.0, %v1844
        %v1846 = vpop.f32.mrb[0].mxu0
        %v1847 = vpop.f32.mrb[0].mxu0
        %v1848 = vpop.f32.mrb[0].mxu0
        %1849 = vdwg.mxu0
        %1850 = vrot.lane.b32.xlu0 %v498, 96
        %v1851 = vpop.permute.xlu0 %1850
        %v1854 = vsel %vm1272, %v1449, 0
        %1856 = vmatprep.subr.bf16.mxu0 0
        %1857 = vmatpush1.bf16.msra.mxu0 %v1851
        %1858 = vmatprep.subr.bf16.mxu0 0
        %1859 = vmatpush1.bf16.msra.mxu0 0
        %1860 = vmatprep.subr.bf16.mxu0 0
        %1861 = vmatpush1.bf16.msra.mxu0 0
        %1862 = vmatprep.subr.bf16.mxu0 0
        %1863 = vmatpush1.bf16.msra.mxu0 0
        %1864 = vmatprep.subr.bf16.mxu0 0
        %1865 = vmatpush1.bf16.msra.mxu0 0
        %1866 = vmatprep.subr.bf16.mxu0 0
        %1867 = vmatpush1.bf16.msra.mxu0 0
        %1868 = vmatprep.subr.bf16.mxu0 0
        %1869 = vmatpush1.bf16.msra.mxu0 0
        %1870 = vmatprep.subr.bf16.mxu0 0
        %1871 = vmatpush1.bf16.msra.mxu0 0
        %1872 = vmatprep.subr.bf16.mxu0 0
        %1873 = vmatpush1.bf16.msra.mxu0 0
        %1874 = vmatprep.subr.bf16.mxu0 0
        %1875 = vmatpush1.bf16.msra.mxu0 0
        %1876 = vmatprep.subr.bf16.mxu0 0
        %1877 = vmatpush1.bf16.msra.mxu0 0
        %1878 = vmatprep.subr.bf16.mxu0 0
        %1879 = vmatpush1.bf16.msra.mxu0 0
        %1880 = vmatprep.subr.bf16.mxu0 0
        %1881 = vmatpush1.bf16.msra.mxu0 0
        %1882 = vmatprep.subr.bf16.mxu0 0
        %1883 = vmatpush1.bf16.msra.mxu0 0
        %1884 = vmatprep.subr.bf16.mxu0 0
        %1885 = vmatpush1.bf16.msra.mxu0 0
        %1886 = vmatprep.subr.bf16.mxu0 0
        %1887 = vmatpush1.bf16.msra.mxu0 0
        %1888 = vmatprep.mubr.bf16.mxu0 0
        %1889 = vmatmul.mubr.bf16.gmra.mrb[0].mxu0 %v1854
        %v1890 = vpop.f32.mrb[0].mxu0
        %v1891 = vadd.f32 %v1509, %v1890
        %v1892 = vpop.f32.mrb[0].mxu0
        %v1893 = vpop.f32.mrb[0].mxu0
        %v1894 = vpop.f32.mrb[0].mxu0
        %1895 = vdwg.mxu0
        %1896 = vrot.lane.b32.xlu0 %v499, 96
        %v1897 = vpop.permute.xlu0 %1896
        %v1900 = vsel %vm1272, %v1450, 0
        %1902 = vmatprep.subr.bf16.mxu0 0
        %1903 = vmatpush1.bf16.msra.mxu0 %v1897
        %1904 = vmatprep.subr.bf16.mxu0 0
        %1905 = vmatpush1.bf16.msra.mxu0 0
        %1906 = vmatprep.subr.bf16.mxu0 0
        %1907 = vmatpush1.bf16.msra.mxu0 0
        %1908 = vmatprep.subr.bf16.mxu0 0
        %1909 = vmatpush1.bf16.msra.mxu0 0
        %1910 = vmatprep.subr.bf16.mxu0 0
        %1911 = vmatpush1.bf16.msra.mxu0 0
        %1912 = vmatprep.subr.bf16.mxu0 0
        %1913 = vmatpush1.bf16.msra.mxu0 0
        %1914 = vmatprep.subr.bf16.mxu0 0
        %1915 = vmatpush1.bf16.msra.mxu0 0
        %1916 = vmatprep.subr.bf16.mxu0 0
        %1917 = vmatpush1.bf16.msra.mxu0 0
        %1918 = vmatprep.subr.bf16.mxu0 0
        %1919 = vmatpush1.bf16.msra.mxu0 0
        %1920 = vmatprep.subr.bf16.mxu0 0
        %1921 = vmatpush1.bf16.msra.mxu0 0
        %1922 = vmatprep.subr.bf16.mxu0 0
        %1923 = vmatpush1.bf16.msra.mxu0 0
        %1924 = vmatprep.subr.bf16.mxu0 0
        %1925 = vmatpush1.bf16.msra.mxu0 0
        %1926 = vmatprep.subr.bf16.mxu0 0
        %1927 = vmatpush1.bf16.msra.mxu0 0
        %1928 = vmatprep.subr.bf16.mxu0 0
        %1929 = vmatpush1.bf16.msra.mxu0 0
        %1930 = vmatprep.subr.bf16.mxu0 0
        %1931 = vmatpush1.bf16.msra.mxu0 0
        %1932 = vmatprep.subr.bf16.mxu0 0
        %1933 = vmatpush1.bf16.msra.mxu0 0
        %1934 = vmatprep.mubr.bf16.mxu0 0
        %1935 = vmatmul.mubr.bf16.gmra.mrb[0].mxu0 %v1900
        %v1936 = vpop.f32.mrb[0].mxu0
        %v1937 = vadd.f32 %v1557, %v1936
        %v1938 = vpop.f32.mrb[0].mxu0
        %v1939 = vpop.f32.mrb[0].mxu0
        %v1940 = vpop.f32.mrb[0].mxu0
        %1941 = vdwg.mxu0
        %1942 = vrot.lane.b32.xlu0 %v520, 96
        %v1943 = vpop.permute.xlu0 %1942
        %v1946 = vsel %vm1272, %v1451, 0
        %1948 = vmatprep.subr.bf16.mxu0 0
        %1949 = vmatpush1.bf16.msra.mxu0 %v1943
        %1950 = vmatprep.subr.bf16.mxu0 0
        %1951 = vmatpush1.bf16.msra.mxu0 0
        %1952 = vmatprep.subr.bf16.mxu0 0
        %1953 = vmatpush1.bf16.msra.mxu0 0
        %1954 = vmatprep.subr.bf16.mxu0 0
        %1955 = vmatpush1.bf16.msra.mxu0 0
        %1956 = vmatprep.subr.bf16.mxu0 0
        %1957 = vmatpush1.bf16.msra.mxu0 0
        %1958 = vmatprep.subr.bf16.mxu0 0
        %1959 = vmatpush1.bf16.msra.mxu0 0
        %1960 = vmatprep.subr.bf16.mxu0 0
        %1961 = vmatpush1.bf16.msra.mxu0 0
        %1962 = vmatprep.subr.bf16.mxu0 0
        %1963 = vmatpush1.bf16.msra.mxu0 0
        %1964 = vmatprep.subr.bf16.mxu0 0
        %1965 = vmatpush1.bf16.msra.mxu0 0
        %1966 = vmatprep.subr.bf16.mxu0 0
        %1967 = vmatpush1.bf16.msra.mxu0 0
        %1968 = vmatprep.subr.bf16.mxu0 0
        %1969 = vmatpush1.bf16.msra.mxu0 0
        %1970 = vmatprep.subr.bf16.mxu0 0
        %1971 = vmatpush1.bf16.msra.mxu0 0
        %1972 = vmatprep.subr.bf16.mxu0 0
        %1973 = vmatpush1.bf16.msra.mxu0 0
        %1974 = vmatprep.subr.bf16.mxu0 0
        %1975 = vmatpush1.bf16.msra.mxu0 0
        %1976 = vmatprep.subr.bf16.mxu0 0
        %1977 = vmatpush1.bf16.msra.mxu0 0
        %1978 = vmatprep.subr.bf16.mxu0 0
        %1979 = vmatpush1.bf16.msra.mxu0 0
        %1980 = vmatprep.mubr.bf16.mxu0 0
        %1981 = vmatmul.mubr.bf16.gmra.mrb[0].mxu0 %v1946
        %v1982 = vpop.f32.mrb[0].mxu0
        %v1983 = vadd.f32 %v1605, %v1982
        %v1984 = vpop.f32.mrb[0].mxu0
        %v1985 = vpop.f32.mrb[0].mxu0
        %v1986 = vpop.f32.mrb[0].mxu0
        %1987 = vdwg.mxu0
        %1988 = vrot.lane.b32.xlu0 %v522, 96
        %v1989 = vpop.permute.xlu0 %1988
        %v1992 = vsel %vm1272, %v1452, 0
        %1994 = vmatprep.subr.bf16.mxu0 0
        %1995 = vmatpush1.bf16.msra.mxu0 %v1989
        %1996 = vmatprep.subr.bf16.mxu0 0
        %1997 = vmatpush1.bf16.msra.mxu0 0
        %1998 = vmatprep.subr.bf16.mxu0 0
        %1999 = vmatpush1.bf16.msra.mxu0 0
        %2000 = vmatprep.subr.bf16.mxu0 0
        %2001 = vmatpush1.bf16.msra.mxu0 0
        %2002 = vmatprep.subr.bf16.mxu0 0
        %2003 = vmatpush1.bf16.msra.mxu0 0
        %2004 = vmatprep.subr.bf16.mxu0 0
        %2005 = vmatpush1.bf16.msra.mxu0 0
        %2006 = vmatprep.subr.bf16.mxu0 0
        %2007 = vmatpush1.bf16.msra.mxu0 0
        %2008 = vmatprep.subr.bf16.mxu0 0
        %2009 = vmatpush1.bf16.msra.mxu0 0
        %2010 = vmatprep.subr.bf16.mxu0 0
        %2011 = vmatpush1.bf16.msra.mxu0 0
        %2012 = vmatprep.subr.bf16.mxu0 0
        %2013 = vmatpush1.bf16.msra.mxu0 0
        %2014 = vmatprep.subr.bf16.mxu0 0
        %2015 = vmatpush1.bf16.msra.mxu0 0
        %2016 = vmatprep.subr.bf16.mxu0 0
        %2017 = vmatpush1.bf16.msra.mxu0 0
        %2018 = vmatprep.subr.bf16.mxu0 0
        %2019 = vmatpush1.bf16.msra.mxu0 0
        %2020 = vmatprep.subr.bf16.mxu0 0
        %2021 = vmatpush1.bf16.msra.mxu0 0
        %2022 = vmatprep.subr.bf16.mxu0 0
        %2023 = vmatpush1.bf16.msra.mxu0 0
        %2024 = vmatprep.subr.bf16.mxu0 0
        %2025 = vmatpush1.bf16.msra.mxu0 0
        %2026 = vmatprep.mubr.bf16.mxu0 0
        %2027 = vmatmul.mubr.bf16.gmra.mrb[0].mxu0 %v1992
        %v2028 = vpop.f32.mrb[0].mxu0
        %v2029 = vadd.f32 %v1653, %v2028
        %v2030 = vpop.f32.mrb[0].mxu0
        %v2031 = vpop.f32.mrb[0].mxu0
        %v2032 = vpop.f32.mrb[0].mxu0
        %2033 = vdwg.mxu0
        %2034 = vrot.lane.b32.xlu0 %v524, 96
        %v2035 = vpop.permute.xlu0 %2034
        %v2038 = vsel %vm1272, %v1453, 0
        %2040 = vmatprep.subr.bf16.mxu0 0
        %2041 = vmatpush1.bf16.msra.mxu0 %v2035
        %2042 = vmatprep.subr.bf16.mxu0 0
        %2043 = vmatpush1.bf16.msra.mxu0 0
        %2044 = vmatprep.subr.bf16.mxu0 0
        %2045 = vmatpush1.bf16.msra.mxu0 0
        %2046 = vmatprep.subr.bf16.mxu0 0
        %2047 = vmatpush1.bf16.msra.mxu0 0
        %2048 = vmatprep.subr.bf16.mxu0 0
        %2049 = vmatpush1.bf16.msra.mxu0 0
        %2050 = vmatprep.subr.bf16.mxu0 0
        %2051 = vmatpush1.bf16.msra.mxu0 0
        %2052 = vmatprep.subr.bf16.mxu0 0
        %2053 = vmatpush1.bf16.msra.mxu0 0
        %2054 = vmatprep.subr.bf16.mxu0 0
        %2055 = vmatpush1.bf16.msra.mxu0 0
        %2056 = vmatprep.subr.bf16.mxu0 0
        %2057 = vmatpush1.bf16.msra.mxu0 0
        %2058 = vmatprep.subr.bf16.mxu0 0
        %2059 = vmatpush1.bf16.msra.mxu0 0
        %2060 = vmatprep.subr.bf16.mxu0 0
        %2061 = vmatpush1.bf16.msra.mxu0 0
        %2062 = vmatprep.subr.bf16.mxu0 0
        %2063 = vmatpush1.bf16.msra.mxu0 0
        %2064 = vmatprep.subr.bf16.mxu0 0
        %2065 = vmatpush1.bf16.msra.mxu0 0
        %2066 = vmatprep.subr.bf16.mxu0 0
        %2067 = vmatpush1.bf16.msra.mxu0 0
        %2068 = vmatprep.subr.bf16.mxu0 0
        %2069 = vmatpush1.bf16.msra.mxu0 0
        %2070 = vmatprep.subr.bf16.mxu0 0
        %2071 = vmatpush1.bf16.msra.mxu0 0
        %2072 = vmatprep.mubr.bf16.mxu0 0
        %2073 = vmatmul.mubr.bf16.gmra.mrb[0].mxu0 %v2038
        %v2074 = vpop.f32.mrb[0].mxu0
        %v2075 = vadd.f32 %v1701, %v2074
        %v2076 = vpop.f32.mrb[0].mxu0
        %v2077 = vpop.f32.mrb[0].mxu0
        %v2078 = vpop.f32.mrb[0].mxu0
        %2079 = vdwg.mxu0
        %2080 = vrot.lane.b32.xlu0 %v526, 96
        %v2081 = vpop.permute.xlu0 %2080
        %v2084 = vsel %vm1272, %v1454, 0
        %2086 = vmatprep.subr.bf16.mxu0 0
        %2087 = vmatpush1.bf16.msra.mxu0 %v2081
        %2088 = vmatprep.subr.bf16.mxu0 0
        %2089 = vmatpush1.bf16.msra.mxu0 0
        %2090 = vmatprep.subr.bf16.mxu0 0
        %2091 = vmatpush1.bf16.msra.mxu0 0
        %2092 = vmatprep.subr.bf16.mxu0 0
        %2093 = vmatpush1.bf16.msra.mxu0 0
        %2094 = vmatprep.subr.bf16.mxu0 0
        %2095 = vmatpush1.bf16.msra.mxu0 0
        %2096 = vmatprep.subr.bf16.mxu0 0
        %2097 = vmatpush1.bf16.msra.mxu0 0
        %2098 = vmatprep.subr.bf16.mxu0 0
        %2099 = vmatpush1.bf16.msra.mxu0 0
        %2100 = vmatprep.subr.bf16.mxu0 0
        %2101 = vmatpush1.bf16.msra.mxu0 0
        %2102 = vmatprep.subr.bf16.mxu0 0
        %2103 = vmatpush1.bf16.msra.mxu0 0
        %2104 = vmatprep.subr.bf16.mxu0 0
        %2105 = vmatpush1.bf16.msra.mxu0 0
        %2106 = vmatprep.subr.bf16.mxu0 0
        %2107 = vmatpush1.bf16.msra.mxu0 0
        %2108 = vmatprep.subr.bf16.mxu0 0
        %2109 = vmatpush1.bf16.msra.mxu0 0
        %2110 = vmatprep.subr.bf16.mxu0 0
        %2111 = vmatpush1.bf16.msra.mxu0 0
        %2112 = vmatprep.subr.bf16.mxu0 0
        %2113 = vmatpush1.bf16.msra.mxu0 0
        %2114 = vmatprep.subr.bf16.mxu0 0
        %2115 = vmatpush1.bf16.msra.mxu0 0
        %2116 = vmatprep.subr.bf16.mxu0 0
        %2117 = vmatpush1.bf16.msra.mxu0 0
        %2118 = vmatprep.mubr.bf16.mxu0 0
        %2119 = vmatmul.mubr.bf16.gmra.mrb[0].mxu0 %v2084
        %v2120 = vpop.f32.mrb[0].mxu0
        %v2121 = vadd.f32 %v1749, %v2120
        %v2122 = vpop.f32.mrb[0].mxu0
        %v2123 = vpop.f32.mrb[0].mxu0
        %v2124 = vpop.f32.mrb[0].mxu0
        %2125 = vdwg.mxu0
        %2126 = vrot.lane.b32.xlu0 %v528, 96
        %v2127 = vpop.permute.xlu0 %2126
        %v2130 = vsel %vm1272, %v1455, 0
        %2132 = vmatprep.subr.bf16.mxu0 0
        %2133 = vmatpush1.bf16.msra.mxu0 %v2127
        %2134 = vmatprep.subr.bf16.mxu0 0
        %2135 = vmatpush1.bf16.msra.mxu0 0
        %2136 = vmatprep.subr.bf16.mxu0 0
        %2137 = vmatpush1.bf16.msra.mxu0 0
        %2138 = vmatprep.subr.bf16.mxu0 0
        %2139 = vmatpush1.bf16.msra.mxu0 0
        %2140 = vmatprep.subr.bf16.mxu0 0
        %2141 = vmatpush1.bf16.msra.mxu0 0
        %2142 = vmatprep.subr.bf16.mxu0 0
        %2143 = vmatpush1.bf16.msra.mxu0 0
        %2144 = vmatprep.subr.bf16.mxu0 0
        %2145 = vmatpush1.bf16.msra.mxu0 0
        %2146 = vmatprep.subr.bf16.mxu0 0
        %2147 = vmatpush1.bf16.msra.mxu0 0
        %2148 = vmatprep.subr.bf16.mxu0 0
        %2149 = vmatpush1.bf16.msra.mxu0 0
        %2150 = vmatprep.subr.bf16.mxu0 0
        %2151 = vmatpush1.bf16.msra.mxu0 0
        %2152 = vmatprep.subr.bf16.mxu0 0
        %2153 = vmatpush1.bf16.msra.mxu0 0
        %2154 = vmatprep.subr.bf16.mxu0 0
        %2155 = vmatpush1.bf16.msra.mxu0 0
        %2156 = vmatprep.subr.bf16.mxu0 0
        %2157 = vmatpush1.bf16.msra.mxu0 0
        %2158 = vmatprep.subr.bf16.mxu0 0
        %2159 = vmatpush1.bf16.msra.mxu0 0
        %2160 = vmatprep.subr.bf16.mxu0 0
        %2161 = vmatpush1.bf16.msra.mxu0 0
        %2162 = vmatprep.subr.bf16.mxu0 0
        %2163 = vmatpush1.bf16.msra.mxu0 0
        %2164 = vmatprep.mubr.bf16.mxu0 0
        %2165 = vmatmul.mubr.bf16.gmra.mrb[0].mxu0 %v2130
        %v2166 = vpop.f32.mrb[0].mxu0
        %v2167 = vadd.f32 %v1797, %v2166
        %v2168 = vpop.f32.mrb[0].mxu0
        %v2169 = vpop.f32.mrb[0].mxu0
        %v2170 = vpop.f32.mrb[0].mxu0
        %2171 = vdwg.mxu0
        %2172 = vrot.lane.b32.xlu0 %v530, 96
        %v2173 = vpop.permute.xlu0 %2172
        %v2176 = vsel %vm1272, %v1456, 0
        %2178 = vmatprep.subr.bf16.mxu0 0
        %2179 = vmatpush1.bf16.msra.mxu0 %v2173
        %2180 = vmatprep.subr.bf16.mxu0 0
        %2181 = vmatpush1.bf16.msra.mxu0 0
        %2182 = vmatprep.subr.bf16.mxu0 0
        %2183 = vmatpush1.bf16.msra.mxu0 0
        %2184 = vmatprep.subr.bf16.mxu0 0
        %2185 = vmatpush1.bf16.msra.mxu0 0
        %2186 = vmatprep.subr.bf16.mxu0 0
        %2187 = vmatpush1.bf16.msra.mxu0 0
        %2188 = vmatprep.subr.bf16.mxu0 0
        %2189 = vmatpush1.bf16.msra.mxu0 0
        %2190 = vmatprep.subr.bf16.mxu0 0
        %2191 = vmatpush1.bf16.msra.mxu0 0
        %2192 = vmatprep.subr.bf16.mxu0 0
        %2193 = vmatpush1.bf16.msra.mxu0 0
        %2194 = vmatprep.subr.bf16.mxu0 0
        %2195 = vmatpush1.bf16.msra.mxu0 0
        %2196 = vmatprep.subr.bf16.mxu0 0
        %2197 = vmatpush1.bf16.msra.mxu0 0
        %2198 = vmatprep.subr.bf16.mxu0 0
        %2199 = vmatpush1.bf16.msra.mxu0 0
        %2200 = vmatprep.subr.bf16.mxu0 0
        %2201 = vmatpush1.bf16.msra.mxu0 0
        %2202 = vmatprep.subr.bf16.mxu0 0
        %2203 = vmatpush1.bf16.msra.mxu0 0
        %2204 = vmatprep.subr.bf16.mxu0 0
        %2205 = vmatpush1.bf16.msra.mxu0 0
        %2206 = vmatprep.subr.bf16.mxu0 0
        %2207 = vmatpush1.bf16.msra.mxu0 0
        %2208 = vmatprep.subr.bf16.mxu0 0
        %2209 = vmatpush1.bf16.msra.mxu0 0
        %2210 = vmatprep.mubr.bf16.mxu0 0
        %2211 = vmatmul.mubr.bf16.gmra.mrb[0].mxu0 %v2176
        %v2212 = vpop.f32.mrb[0].mxu0
        %v2213 = vadd.f32 %v1845, %v2212
        %v2214 = vpop.f32.mrb[0].mxu0
        %v2215 = vpop.f32.mrb[0].mxu0
        %v2216 = vpop.f32.mrb[0].mxu0
        %2217 = vdwg.mxu0
        %v2218 = vmul.f32 %v1891, %v1434
        %v2219 = vmul.f32 %v1937, %v1436
        %v2220 = vmul.f32 %v1983, %v1438
        %v2221 = vmul.f32 %v2029, %v1440
        %v2222 = vmul.f32 %v2075, %v1442
        %v2223 = vmul.f32 %v2121, %v1444
        %v2224 = vmul.f32 %v2167, %v1446
        %v2225 = vmul.f32 %v2213, %v1448
        %2228 = vrot.lane.b32.xlu0 %v2220, 8
        %v2229 = vpop.permute.xlu0 %2228
        %2230 = vrot.lane.b32.xlu0 %v2221, 8
        %v2231 = vpop.permute.xlu0 %2230
        %2236 = vrot.lane.b32.xlu0 %v2222, 16
        %v2237 = vpop.permute.xlu0 %2236
        %2238 = vrot.lane.b32.xlu0 %v2223, 16
        %v2239 = vpop.permute.xlu0 %2238
        %2244 = vrot.lane.b32.xlu0 %v2224, 24
        %v2245 = vpop.permute.xlu0 %2244
        %2246 = vrot.lane.b32.xlu0 %v2225, 24
        %v2247 = vpop.permute.xlu0 %2246
        %v2250 = vsel %vm531, %v2218, %v2229
        %v2251 = vsel %vm531, %v2219, %v2231
        %v2252 = vsel %vm1272, %v2250, %v2237
        %v2253 = vsel %vm1272, %v2251, %v2239
        %vm2254 = vcmask 195584
        %v2255 = vsel %vm2254, %v2252, %v2245
        %v2256 = vsel %vm2254, %v2253, %v2247
        %v2257 = vpack.c.bf16 %v2256, %v2255
        %v2258 = vld [vmem:[%s4] sm:$0xf]
        %v2259 = vld [vmem:[%s4 + $0x4] sm:$0xf]
        %v2260 = vld [vmem:[%s4 + $0x8] sm:$0xf]
        %v2261 = vld [vmem:[%s4 + $0xc] sm:$0xf]
        %v2266 = vunpack.c.l.b16 %v2258
        %v2267 = vunpack.c.l.b16 %v2259
        %v2268 = vunpack.c.l.b16 %v2260
        %v2269 = vunpack.c.l.b16 %v2261
        %v2270 = vpack.c.b16 %v2267, %v2266
        %v2271 = vpack.c.b16 %v2269, %v2268
        %v2275 = vsel %vm265, %v2257, 0
        %2277 = vmatprep.subr.bf16.mxu0 0
        %2278 = vmatpush1.bf16.msra.mxu0 %v2270
        %2279 = vmatprep.subr.bf16.mxu0 0
        %2280 = vmatpush1.bf16.msra.mxu0 %v2271
        %2281 = vmatprep.subr.bf16.mxu0 0
        %2282 = vmatpush1.bf16.msra.mxu0 0
        %2283 = vmatprep.subr.bf16.mxu0 0
        %2284 = vmatpush1.bf16.msra.mxu0 0
        %2285 = vmatprep.subr.bf16.mxu0 0
        %2286 = vmatpush1.bf16.msra.mxu0 0
        %2287 = vmatprep.subr.bf16.mxu0 0
        %2288 = vmatpush1.bf16.msra.mxu0 0
        %2289 = vmatprep.subr.bf16.mxu0 0
        %2290 = vmatpush1.bf16.msra.mxu0 0
        %2291 = vmatprep.subr.bf16.mxu0 0
        %2292 = vmatpush1.bf16.msra.mxu0 0
        %2293 = vmatprep.subr.bf16.mxu0 0
        %2294 = vmatpush1.bf16.msra.mxu0 0
        %2295 = vmatprep.subr.bf16.mxu0 0
        %2296 = vmatpush1.bf16.msra.mxu0 0
        %2297 = vmatprep.subr.bf16.mxu0 0
        %2298 = vmatpush1.bf16.msra.mxu0 0
        %2299 = vmatprep.subr.bf16.mxu0 0
        %2300 = vmatpush1.bf16.msra.mxu0 0
        %2301 = vmatprep.subr.bf16.mxu0 0
        %2302 = vmatpush1.bf16.msra.mxu0 0
        %2303 = vmatprep.subr.bf16.mxu0 0
        %2304 = vmatpush1.bf16.msra.mxu0 0
        %2305 = vmatprep.subr.bf16.mxu0 0
        %2306 = vmatpush1.bf16.msra.mxu0 0
        %2307 = vmatprep.subr.bf16.mxu0 0
        %2308 = vmatpush1.bf16.msra.mxu0 0
        %2309 = vmatprep.mubr.bf16.mxu0 0
        %2310 = vmatmul.mubr.bf16.gmra.mrb[0].mxu0 %v2275
        %v2311 = vpop.f32.mrb[0].mxu0
        %v2312 = vadd.f32 0.0, %v2311
        %v2313 = vpop.f32.mrb[0].mxu0
        %v2314 = vpop.f32.mrb[0].mxu0
        %v2315 = vadd.f32 0.0, %v2314
        %v2316 = vpop.f32.mrb[0].mxu0
        %2317 = vdwg.mxu0
        %2318 = vst.msk [vmem:[%s236] sm:$0xff] %vm265, %v2312
        %2319 = vst.msk [vmem:[%s236 + $0x8] sm:$0xff] %vm265, %v2315
        %s2320 = sand.u32 %s142, 1
        %s2321 = scalar_lea.sflag [#allocation3], %s2320
        %s2322 = sand.u32 %s142, 1
        %s2323 = smul.addr %s2322, 16
        %s2324 = scalar_lea.vmem [#allocation2], %s2323
        // Predicated region
        $region41: #{_lambda_.1} parent=39 // pred_check
          %p2325 = pneg %p152
        $region42: #{_lambda_.1} parent=39 // pred_check_branch
          %2327 = sbr.rel (%p2325) target = $region44
        $region43: #{_lambda_.1} parent=39 // pred_region
          %s2328 = smul.u32 2, %s19
          %s2330 = ssub.s32 256, 256
          %2331 = vsyncadd %s2321, %s2330
          %s2332 = smul.addr %s2328, 128
          %s2333 = scalar_lea.hbm %s5, %s2332
          %s2334 = sshll.u32 %s2324, 4
          %s2335 = int_to_ptr.vmem [resolvable:$true] %s2334
          %2340 = dma.vmem_to_hbm [thread:$0]  %s2335, 256, %s2333, %s2321, 128, 128, 8
        $region44: #{_lambda_.1} parent=39 // pred_fallthru
          _
      $region40: #{_lambda_.1} parent=5 // pred_fallthru
        _
      %p2341 = scmp.le.s32.totalorder 2, %s14
      // Predicated region
      $region45: #{_lambda_.1} parent=5 // pred_check
        %p2342 = pneg %p2341
      $region46: #{_lambda_.1} parent=5 // pred_check_branch
        %2344 = sbr.rel (%p2342) target = $region48
      $region47: #{_lambda_.1} parent=5 // pred_region
        %s2345 = ssub.s32 %s14, 2
        // Predicated region
        $region49: #{_lambda_.1} parent=47 // pred_check
          %p2346 = pneg %p158
        $region50: #{_lambda_.1} parent=47 // pred_check_branch
          %2348 = sbr.rel (%p2346) target = $region52
        $region51: #{_lambda_.1} parent=47 // pred_region
          %s2349 = sand.u32 %s143, 1
          %s2350 = scalar_lea.sflag [#allocation3], %s2349
          %s2351 = sand.u32 %s143, 1
          %s2352 = smul.addr %s2351, 16
          %s2353 = scalar_lea.vmem [#allocation2], %s2352
          %2354 = dma.done %s2350, 256
        $region52: #{_lambda_.1} parent=47 // pred_fallthru
          _
      $region48: #{_lambda_.1} parent=5 // pred_fallthru
        _
    $region6: #{_lambda_.1} parent=1 // loop_footer
      %s18 = sadd.s32 1, %s14
    $region7: #{_lambda_.1} parent=1 // loop_footer_branch
      %13 = sbr.rel target = $region3
    $region8: #{_lambda_.1} parent=1 // loop_exit
      _
    %2355 = vsyncpa [#allocation3], 1
    %s2356 = scalar_lea.sflag [#allocation3], 1
    %2357 = vsyncpa %s2356, 1

</llo_original>
